<compile_context>
chip_gen: v7x
topology: tpu7x:2x2x1
jax: 0.10.0
libtpu: 0.0.40
codegen_flags: <defaults>
</compile_context>

<pallas_src>
import functools
import math

import jax
import jax.numpy as jnp
from jax.experimental import pallas as pl
from jax.experimental.pallas import tpu as pltpu


_SIZING_VMEM_BUDGET = 32 * 1024 * 1024   # conservative tile-sizing budget
_VMEM_LIMIT_BYTES = 48 * 1024 * 1024     # safe on v5e/v6e (128 MiB) and v7x (64 MiB/TC)

# Cody-Waite split of pi (hi part exactly representable in f32).
_PI_HI = 3.140625
_PI_LO = 9.6765358979323846e-04
_INV_PI = 0.31830988618379067


def _round_up(a, b):
    return ((a + b - 1) // b) * b


def _cdiv(a, b):
    return (a + b - 1) // b


# ---------------------------------------------------------------------------
# In-kernel sin: range-reduce to r in [-pi/2, pi/2], odd Taylor poly to r^11.
# Sign of (-1)^n is applied by flipping r via an integer-LSB select.
# ---------------------------------------------------------------------------
def _sin(x):
    n = jnp.floor(x * _INV_PI + 0.5)              # nearest integer to x/pi
    r = (x - n * _PI_HI) - n * _PI_LO             # r in [-pi/2, pi/2]
    odd = (n.astype(jnp.int32) & 1) == 1
    r = jnp.where(odd, -r, r)                     # sin is odd: (-1)^n sin(r)
    r2 = r * r
    p = -2.5052108385441720e-08                   # -1/11!
    p = p * r2 + 2.7557319223985893e-06           #  1/9!
    p = p * r2 - 1.9841269841269841e-04           # -1/7!
    p = p * r2 + 8.3333333333333333e-03           #  1/5!
    p = p * r2 - 1.6666666666666666e-01           # -1/3!
    return r + r * (r2 * p)


# ---------------------------------------------------------------------------
# Fused kernel. Ref order:
#   x_raw, w_embed, b_embed, [wa, ba, wb, bb] * n_hidden, w_out, b_out, o_ref
# Activations are (wc, tm); x always equals cat([true_x, zeros]) exactly
# because all padded weight rows/cols are zero and sin(0) = 0.
# ---------------------------------------------------------------------------
def _fcnet_kernel(x_ref, *refs, n_hidden):
    o_ref = refs[-1]
    w = refs[:-1]

    raw = x_ref[...]                                            # (C, tm)
    # x = cat([2*(raw-lo)/(hi-lo) - 1, zeros])  -- K=C embed matmul + bias.
    x = jnp.dot(w[0][...], raw, preferred_element_type=jnp.float32) + w[1][...]

    k = 2
    for i in range(n_hidden):
        wa, ba = w[k][...], w[k + 1][...]
        wb, bb = w[k + 2][...], w[k + 3][...]
        k += 4
        # Block 0 consumes the raw input (normalisation folded into wa/ba),
        # keeping the first contraction at K=C instead of K=wc.
        lhs = raw if i == 0 else x
        h = _sin(jnp.dot(wa, lhs, preferred_element_type=jnp.float32) + ba)
        h = _sin(jnp.dot(wb, h, preferred_element_type=jnp.float32) + bb)
        x = x + h                       # == h + cat([x, zeros]) exactly

    y = jnp.dot(w[k][...], x, preferred_element_type=jnp.float32) + w[k + 1][...]
    o_ref[...] = y.astype(o_ref.dtype)                           # (out_dim, tm)


# ---------------------------------------------------------------------------
# Host-side weight preparation (residual / normalisation folding + padding).
# torch.nn.Linear convention: W is (out_features, in_features), y = W x + b
# when activations are transposed (features on rows).
# ---------------------------------------------------------------------------
def _prepare_weights(params, bounds, layers, wc):
    C = layers[0]
    n_hidden = len(layers) - 2
    out_dim = layers[-1]
    f32 = jnp.float32

    bounds = jnp.asarray(bounds, f32)
    lo, hi = bounds[:, 0], bounds[:, 1]
    scale = 2.0 / (hi - lo)                        # (C,)
    shift = -2.0 * lo / (hi - lo) - 1.0            # (C,)

    def rowpad(a, rows):
        return jnp.pad(a, ((0, rows - a.shape[0]), (0, 0)))

    # "embed": produces cat([normalised x, zeros((wc-C), tm)]) via one K=C dot.
    w_embed = rowpad(jnp.diag(scale), wc)                          # (wc, C)
    b_embed = jnp.pad(shift, (0, wc - C)).reshape(wc, 1)
    ws = [w_embed, b_embed]

    for i in range(n_hidden):
        wa = jnp.asarray(params[f"w{2 * i}"], f32)                 # (d_{i+1}, d_i)
        ba = jnp.asarray(params[f"b{2 * i}"], f32)
        wb = jnp.asarray(params[f"w{2 * i + 1}"], f32)             # (d_{i+1}, d_{i+1})
        bb = jnp.asarray(params[f"b{2 * i + 1}"], f32)
        if i == 0:
            # Fold the input normalisation into layer 0 (keeps K = C).
            ba = ba + wa @ shift
            wa = wa * scale[None, :]
        else:
            wa = jnp.pad(wa, ((0, 0), (0, wc - wa.shape[1])))      # zero K-pad
        wa = rowpad(wa, wc)                                        # zero out-pad
        ba = jnp.pad(ba, (0, wc - ba.shape[0])).reshape(wc, 1)
        wb = jnp.pad(wb, ((0, wc - wb.shape[0]), (0, wc - wb.shape[1])))
        bb = jnp.pad(bb, (0, wc - bb.shape[0])).reshape(wc, 1)
        ws += [wa, ba, wb, bb]

    wo = jnp.asarray(params[f"w{2 * n_hidden}"], f32)              # (out, d_last)
    bo = jnp.asarray(params[f"b{2 * n_hidden}"], f32)
    wo = jnp.pad(wo, ((0, 0), (0, wc - wo.shape[1])))
    ws += [wo, bo.reshape(out_dim, 1)]
    return ws


def _choose_tile(HW, B, C, wc, out_dim, weight_bytes):
    # per-pixel-column VMEM bytes: double-buffered in/out blocks + ~6 live
    # (wc, tm) f32 activation slabs (carry, h, dot results, sin temps).
    per_col = 4 * (2 * C + 2 * out_dim + 6 * wc)
    avail = max(_SIZING_VMEM_BUDGET - 2 * weight_bytes, 2 * 1024 * 1024)
    tm = 128 * int(max(1, min(16, avail // per_col // 128)))       # <= 2048
    tm = min(tm, _round_up(HW, 128))
    # keep at least 2 grid steps so both v7x TensorCores get work
    if B * _cdiv(HW, tm) < 2 and HW > 128:
        tm = _round_up(_cdiv(HW, 2), 128)
    return tm


# ---------------------------------------------------------------------------
# Wrapper: one fused pallas_call over grid (B, pixel_tiles).
# ---------------------------------------------------------------------------
def fcnet_forward(params, x, bounds, layers):
    layers = tuple(int(l) for l in layers)
    B, C, H, W = x.shape
    assert C == layers[0]
    n_hidden = len(layers) - 2
    for i in range(n_hidden):
        assert layers[i + 1] >= layers[i], "FCNet requires non-decreasing widths"
    out_dim = layers[-1]
    wc = _round_up(max(layers[:-1]), 8)          # carried feature width (sublanes)

    wlist = _prepare_weights(params, bounds, layers, wc)
    weight_bytes = 4 * sum(math.prod(w.shape) for w in wlist)

    HW = H * W
    tm = _choose_tile(HW, B, C, wc, out_dim, weight_bytes)
    HWp = _round_up(HW, tm)

    x3 = x.reshape(B, C, HW)                     # free reshape, no permute
    if HWp != HW:
        x3 = jnp.pad(x3, ((0, 0), (0, 0), (0, HWp - HW)))

    in_specs = [pl.BlockSpec((None, C, tm), lambda b, i: (b, 0, i))]
    for w in wlist:                              # constant index -> fetched once
        in_specs.append(pl.BlockSpec(w.shape, lambda b, i: (0, 0)))

    out = pl.pallas_call(
        functools.partial(_fcnet_kernel, n_hidden=n_hidden),
        out_shape=jax.ShapeDtypeStruct((B, out_dim, HWp), x.dtype),
        grid=(B, HWp // tm),
        in_specs=in_specs,
        out_specs=pl.BlockSpec((None, out_dim, tm), lambda b, i: (b, 0, i)),
        compiler_params=pltpu.CompilerParams(
            dimension_semantics=("parallel", "parallel"),
            vmem_limit_bytes=_VMEM_LIMIT_BYTES),
    )(x3, *wlist)

    if HWp != HW:
        out = out[:, :, :HW]
    return out.reshape(B, out_dim, H, W)         # already channel-first


# ---------------------------------------------------------------------------
# Parameter init matching torch.nn.Linear defaults (uniform +-1/sqrt(fan_in)),
# weights stored in torch convention (out_features, in_features).
# ---------------------------------------------------------------------------
def init_fcnet_params(key, layers):
    n_hidden = len(layers) - 2
    sizes = []
    for i in range(n_hidden):
        sizes.append((layers[i + 1], layers[i]))
        sizes.append((layers[i + 1], layers[i + 1]))
    sizes.append((layers[-1], layers[-2]))

    params = {}
    keys = jax.random.split(key, len(sizes))
    for j, (fan_out, fan_in) in enumerate(sizes):
        k1, k2 = jax.random.split(keys[j])
        bnd = 1.0 / math.sqrt(fan_in)
        params[f"w{j}"] = jax.random.uniform(
            k1, (fan_out, fan_in), jnp.float32, -bnd, bnd)
        params[f"b{j}"] = jax.random.uniform(
            k2, (fan_out,), jnp.float32, -bnd, bnd)
    return params


# Pure-JAX reference mirroring the torch forward (for correctness check).
def fcnet_reference(params, x, bounds, layers):
    B, C, H, W = x.shape
    n_hidden = len(layers) - 2
    hp = jax.lax.Precision.HIGHEST
    xm = jnp.transpose(x, (0, 2, 3, 1)).reshape(B * H * W, C)
    h = (xm - bounds[:, 0]) / (bounds[:, 1] - bounds[:, 0])
    xv = 2.0 * h - 1.0
    for i in range(n_hidden):
        h1 = jnp.sin(jnp.dot(xv, params[f"w{2*i}"].T, precision=hp)
                     + params[f"b{2*i}"])
        h2 = jnp.sin(jnp.dot(h1, params[f"w{2*i+1}"].T, precision=hp)
                     + params[f"b{2*i+1}"])
        pad_w = layers[i + 1] - layers[i]
        xv = h2 + jnp.concatenate(
            [xv, jnp.zeros((xv.shape[0], pad_w), xv.dtype)], axis=1)
    y = (jnp.dot(xv, params[f"w{2*n_hidden}"].T, precision=hp)
         + params[f"b{2*n_hidden}"])
    return jnp.transpose(y.reshape(B, H, W, layers[-1]), (0, 3, 1, 2))


if __name__ == "__main__":
    # batch=2, channels=4, spatial 16x16, layers = [4, 32, 32, 1]
    B, Hs, Ws = 2, 16, 16
    layers = (4, 32, 32, 1)

    key = jax.random.PRNGKey(0)
    kp, kx, kb = jax.random.split(key, 3)

    params = init_fcnet_params(kp, layers)
    x = jax.random.normal(kx, (B, layers[0], Hs, Ws), jnp.float32)
    lo = jax.random.uniform(kb, (layers[0],), jnp.float32, -1.0, 0.0)
    bounds = jnp.stack([lo, lo + 2.0], axis=1)           # (C, 2), hi > lo

    fwd = jax.jit(functools.partial(fcnet_forward, layers=layers))
    out = fwd(params, x, bounds)
    jax.block_until_ready(out)

    assert out.shape == (B, layers[-1], Hs, Ws) and out.dtype == jnp.float32
    assert bool(jnp.all(jnp.isfinite(out)))

    ref = fcnet_reference(params, x, bounds, layers)
    err = float(jnp.max(jnp.abs(out - ref)))
    assert err < 5e-3, f"max abs error vs reference: {err}"

    print("KERNEL_OK")
</pallas_src>

<mosaic_0001>
module attributes {stable_mosaic.version = 11 : i64} {
  func.func @_fcnet_kernel(%arg0: i32, %arg1: i32, %arg2: memref<1x4x256xf32, #tpu.memory_space<vmem>>, %arg3: memref<32x4xf32, #tpu.memory_space<vmem>>, %arg4: memref<32x1xf32, #tpu.memory_space<vmem>>, %arg5: memref<32x4xf32, #tpu.memory_space<vmem>>, %arg6: memref<32x1xf32, #tpu.memory_space<vmem>>, %arg7: memref<32x32xf32, #tpu.memory_space<vmem>>, %arg8: memref<32x1xf32, #tpu.memory_space<vmem>>, %arg9: memref<32x32xf32, #tpu.memory_space<vmem>>, %arg10: memref<32x1xf32, #tpu.memory_space<vmem>>, %arg11: memref<32x32xf32, #tpu.memory_space<vmem>>, %arg12: memref<32x1xf32, #tpu.memory_space<vmem>>, %arg13: memref<1x32xf32, #tpu.memory_space<vmem>>, %arg14: memref<1x1xf32, #tpu.memory_space<vmem>>, %arg15: memref<1x1x256xf32, #tpu.memory_space<vmem>>) attributes {dimension_semantics = [#tpu.dimension_semantics<parallel>, #tpu.dimension_semantics<parallel>], iteration_bounds = array<i64: 2, 1>, scalar_prefetch = 0 : i64, scratch_operands = 0 : i64, tpu.core_type = #tpu.core_type<tc>, window_params = [{transform_indices = @transform_0, window_bounds = array<i64: 1, 4, 256>}, {pipeline_mode = #tpu.pipeline_mode<synchronous>, transform_indices = @transform_1, window_bounds = array<i64: 32, 4>}, {pipeline_mode = #tpu.pipeline_mode<synchronous>, transform_indices = @transform_2, window_bounds = array<i64: 32, 1>}, {pipeline_mode = #tpu.pipeline_mode<synchronous>, transform_indices = @transform_3, window_bounds = array<i64: 32, 4>}, {pipeline_mode = #tpu.pipeline_mode<synchronous>, transform_indices = @transform_4, window_bounds = array<i64: 32, 1>}, {pipeline_mode = #tpu.pipeline_mode<synchronous>, transform_indices = @transform_5, window_bounds = array<i64: 32, 32>}, {pipeline_mode = #tpu.pipeline_mode<synchronous>, transform_indices = @transform_6, window_bounds = array<i64: 32, 1>}, {pipeline_mode = #tpu.pipeline_mode<synchronous>, transform_indices = @transform_7, window_bounds = array<i64: 32, 32>}, {pipeline_mode = #tpu.pipeline_mode<synchronous>, transform_indices = @transform_8, window_bounds = array<i64: 32, 1>}, {pipeline_mode = #tpu.pipeline_mode<synchronous>, transform_indices = @transform_9, window_bounds = array<i64: 32, 32>}, {pipeline_mode = #tpu.pipeline_mode<synchronous>, transform_indices = @transform_10, window_bounds = array<i64: 32, 1>}, {pipeline_mode = #tpu.pipeline_mode<synchronous>, transform_indices = @transform_11, window_bounds = array<i64: 1, 32>}, {pipeline_mode = #tpu.pipeline_mode<synchronous>, transform_indices = @transform_12, window_bounds = array<i64: 1, 1>}, {transform_indices = @transform_13, window_bounds = array<i64: 1, 1, 256>}]} {
    %c0 = arith.constant 0 : index
    %c0_0 = arith.constant 0 : index
    %c0_1 = arith.constant 0 : index
    %0 = vector.load %arg2[%c0, %c0_0, %c0_1] : memref<1x4x256xf32, #tpu.memory_space<vmem>>, vector<1x4x256xf32>
    %1 = vector.shape_cast %0 : vector<1x4x256xf32> to vector<4x256xf32>
    %c0_2 = arith.constant 0 : index
    %c0_3 = arith.constant 0 : index
    %2 = vector.load %arg3[%c0_2, %c0_3] : memref<32x4xf32, #tpu.memory_space<vmem>>, vector<32x4xf32>
    %cst = arith.constant dense<0.000000e+00> : vector<32x256xf32>
    %3 = tpu.matmul %2, %1, %cst {dimension_numbers = #tpu.dot_dimension_numbers<[1], [0], [0], [1], [0, 0, 1, 1], [], []>} : vector<32x4xf32>, vector<4x256xf32>, vector<32x256xf32> -> vector<32x256xf32>
    %c0_4 = arith.constant 0 : index
    %c0_5 = arith.constant 0 : index
    %4 = vector.load %arg4[%c0_4, %c0_5] : memref<32x1xf32, #tpu.memory_space<vmem>>, vector<32x1xf32>
    %5 = vector.broadcast %4 : vector<32x1xf32> to vector<32x256xf32>
    %6 = arith.addf %3, %5 : vector<32x256xf32>
    %c0_6 = arith.constant 0 : index
    %c0_7 = arith.constant 0 : index
    %7 = vector.load %arg5[%c0_6, %c0_7] : memref<32x4xf32, #tpu.memory_space<vmem>>, vector<32x4xf32>
    %c0_8 = arith.constant 0 : index
    %c0_9 = arith.constant 0 : index
    %8 = vector.load %arg6[%c0_8, %c0_9] : memref<32x1xf32, #tpu.memory_space<vmem>>, vector<32x1xf32>
    %c0_10 = arith.constant 0 : index
    %c0_11 = arith.constant 0 : index
    %9 = vector.load %arg7[%c0_10, %c0_11] : memref<32x32xf32, #tpu.memory_space<vmem>>, vector<32x32xf32>
    %c0_12 = arith.constant 0 : index
    %c0_13 = arith.constant 0 : index
    %10 = vector.load %arg8[%c0_12, %c0_13] : memref<32x1xf32, #tpu.memory_space<vmem>>, vector<32x1xf32>
    %cst_14 = arith.constant dense<0.000000e+00> : vector<32x256xf32>
    %11 = tpu.matmul %7, %1, %cst_14 {dimension_numbers = #tpu.dot_dimension_numbers<[1], [0], [0], [1], [0, 0, 1, 1], [], []>} : vector<32x4xf32>, vector<4x256xf32>, vector<32x256xf32> -> vector<32x256xf32>
    %12 = vector.broadcast %8 : vector<32x1xf32> to vector<32x256xf32>
    %13 = arith.addf %11, %12 : vector<32x256xf32>
    %cst_15 = arith.constant 0.318309873 : f32
    %14 = vector.broadcast %cst_15 : f32 to vector<32x256xf32>
    %15 = arith.mulf %13, %14 : vector<32x256xf32>
    %cst_16 = arith.constant 5.000000e-01 : f32
    %16 = vector.broadcast %cst_16 : f32 to vector<32x256xf32>
    %17 = arith.addf %15, %16 : vector<32x256xf32>
    %18 = math.floor %17 : vector<32x256xf32>
    %cst_17 = arith.constant 3.140625 : f32
    %19 = vector.broadcast %cst_17 : f32 to vector<32x256xf32>
    %20 = arith.mulf %18, %19 : vector<32x256xf32>
    %21 = arith.subf %13, %20 : vector<32x256xf32>
    %cst_18 = arith.constant 9.67653584E-4 : f32
    %22 = vector.broadcast %cst_18 : f32 to vector<32x256xf32>
    %23 = arith.mulf %18, %22 : vector<32x256xf32>
    %24 = arith.subf %21, %23 : vector<32x256xf32>
    %25 = arith.fptosi %18 : vector<32x256xf32> to vector<32x256xi32>
    %c1_i32 = arith.constant 1 : i32
    %26 = vector.broadcast %c1_i32 : i32 to vector<32x256xi32>
    %27 = arith.andi %25, %26 : vector<32x256xi32>
    %c1_i32_19 = arith.constant 1 : i32
    %28 = vector.broadcast %c1_i32_19 : i32 to vector<32x256xi32>
    %29 = arith.cmpi eq, %27, %28 : vector<32x256xi32>
    %cst_20 = arith.constant 0.000000e+00 : f32
    %30 = vector.broadcast %cst_20 : f32 to vector<32x256xf32>
    %31 = arith.subf %30, %24 : vector<32x256xf32>
    %32 = arith.select %29, %31, %24 : vector<32x256xi1>, vector<32x256xf32>
    %33 = arith.mulf %32, %32 : vector<32x256xf32>
    %cst_21 = arith.constant -2.50521079E-8 : f32
    %34 = vector.broadcast %cst_21 : f32 to vector<32x256xf32>
    %35 = arith.mulf %34, %33 : vector<32x256xf32>
    %cst_22 = arith.constant 2.75573188E-6 : f32
    %36 = vector.broadcast %cst_22 : f32 to vector<32x256xf32>
    %37 = arith.addf %35, %36 : vector<32x256xf32>
    %38 = arith.mulf %37, %33 : vector<32x256xf32>
    %cst_23 = arith.constant 1.98412701E-4 : f32
    %39 = vector.broadcast %cst_23 : f32 to vector<32x256xf32>
    %40 = arith.subf %38, %39 : vector<32x256xf32>
    %41 = arith.mulf %40, %33 : vector<32x256xf32>
    %cst_24 = arith.constant 0.00833333377 : f32
    %42 = vector.broadcast %cst_24 : f32 to vector<32x256xf32>
    %43 = arith.addf %41, %42 : vector<32x256xf32>
    %44 = arith.mulf %43, %33 : vector<32x256xf32>
    %cst_25 = arith.constant 0.166666672 : f32
    %45 = vector.broadcast %cst_25 : f32 to vector<32x256xf32>
    %46 = arith.subf %44, %45 : vector<32x256xf32>
    %47 = arith.mulf %33, %46 : vector<32x256xf32>
    %48 = arith.mulf %32, %47 : vector<32x256xf32>
    %49 = arith.addf %32, %48 : vector<32x256xf32>
    %cst_26 = arith.constant dense<0.000000e+00> : vector<32x256xf32>
    %50 = tpu.matmul %9, %49, %cst_26 {dimension_numbers = #tpu.dot_dimension_numbers<[1], [0], [0], [1], [0, 0, 1, 1], [], []>} : vector<32x32xf32>, vector<32x256xf32>, vector<32x256xf32> -> vector<32x256xf32>
    %51 = vector.broadcast %10 : vector<32x1xf32> to vector<32x256xf32>
    %52 = arith.addf %50, %51 : vector<32x256xf32>
    %cst_27 = arith.constant 0.318309873 : f32
    %53 = vector.broadcast %cst_27 : f32 to vector<32x256xf32>
    %54 = arith.mulf %52, %53 : vector<32x256xf32>
    %cst_28 = arith.constant 5.000000e-01 : f32
    %55 = vector.broadcast %cst_28 : f32 to vector<32x256xf32>
    %56 = arith.addf %54, %55 : vector<32x256xf32>
    %57 = math.floor %56 : vector<32x256xf32>
    %cst_29 = arith.constant 3.140625 : f32
    %58 = vector.broadcast %cst_29 : f32 to vector<32x256xf32>
    %59 = arith.mulf %57, %58 : vector<32x256xf32>
    %60 = arith.subf %52, %59 : vector<32x256xf32>
    %cst_30 = arith.constant 9.67653584E-4 : f32
    %61 = vector.broadcast %cst_30 : f32 to vector<32x256xf32>
    %62 = arith.mulf %57, %61 : vector<32x256xf32>
    %63 = arith.subf %60, %62 : vector<32x256xf32>
    %64 = arith.fptosi %57 : vector<32x256xf32> to vector<32x256xi32>
    %c1_i32_31 = arith.constant 1 : i32
    %65 = vector.broadcast %c1_i32_31 : i32 to vector<32x256xi32>
    %66 = arith.andi %64, %65 : vector<32x256xi32>
    %c1_i32_32 = arith.constant 1 : i32
    %67 = vector.broadcast %c1_i32_32 : i32 to vector<32x256xi32>
    %68 = arith.cmpi eq, %66, %67 : vector<32x256xi32>
    %cst_33 = arith.constant 0.000000e+00 : f32
    %69 = vector.broadcast %cst_33 : f32 to vector<32x256xf32>
    %70 = arith.subf %69, %63 : vector<32x256xf32>
    %71 = arith.select %68, %70, %63 : vector<32x256xi1>, vector<32x256xf32>
    %72 = arith.mulf %71, %71 : vector<32x256xf32>
    %cst_34 = arith.constant -2.50521079E-8 : f32
    %73 = vector.broadcast %cst_34 : f32 to vector<32x256xf32>
    %74 = arith.mulf %73, %72 : vector<32x256xf32>
    %cst_35 = arith.constant 2.75573188E-6 : f32
    %75 = vector.broadcast %cst_35 : f32 to vector<32x256xf32>
    %76 = arith.addf %74, %75 : vector<32x256xf32>
    %77 = arith.mulf %76, %72 : vector<32x256xf32>
    %cst_36 = arith.constant 1.98412701E-4 : f32
    %78 = vector.broadcast %cst_36 : f32 to vector<32x256xf32>
    %79 = arith.subf %77, %78 : vector<32x256xf32>
    %80 = arith.mulf %79, %72 : vector<32x256xf32>
    %cst_37 = arith.constant 0.00833333377 : f32
    %81 = vector.broadcast %cst_37 : f32 to vector<32x256xf32>
    %82 = arith.addf %80, %81 : vector<32x256xf32>
    %83 = arith.mulf %82, %72 : vector<32x256xf32>
    %cst_38 = arith.constant 0.166666672 : f32
    %84 = vector.broadcast %cst_38 : f32 to vector<32x256xf32>
    %85 = arith.subf %83, %84 : vector<32x256xf32>
    %86 = arith.mulf %72, %85 : vector<32x256xf32>
    %87 = arith.mulf %71, %86 : vector<32x256xf32>
    %88 = arith.addf %71, %87 : vector<32x256xf32>
    %89 = arith.addf %6, %88 : vector<32x256xf32>
    %c0_39 = arith.constant 0 : index
    %c0_40 = arith.constant 0 : index
    %90 = vector.load %arg9[%c0_39, %c0_40] : memref<32x32xf32, #tpu.memory_space<vmem>>, vector<32x32xf32>
    %c0_41 = arith.constant 0 : index
    %c0_42 = arith.constant 0 : index
    %91 = vector.load %arg10[%c0_41, %c0_42] : memref<32x1xf32, #tpu.memory_space<vmem>>, vector<32x1xf32>
    %c0_43 = arith.constant 0 : index
    %c0_44 = arith.constant 0 : index
    %92 = vector.load %arg11[%c0_43, %c0_44] : memref<32x32xf32, #tpu.memory_space<vmem>>, vector<32x32xf32>
    %c0_45 = arith.constant 0 : index
    %c0_46 = arith.constant 0 : index
    %93 = vector.load %arg12[%c0_45, %c0_46] : memref<32x1xf32, #tpu.memory_space<vmem>>, vector<32x1xf32>
    %cst_47 = arith.constant dense<0.000000e+00> : vector<32x256xf32>
    %94 = tpu.matmul %90, %89, %cst_47 {dimension_numbers = #tpu.dot_dimension_numbers<[1], [0], [0], [1], [0, 0, 1, 1], [], []>} : vector<32x32xf32>, vector<32x256xf32>, vector<32x256xf32> -> vector<32x256xf32>
    %95 = vector.broadcast %91 : vector<32x1xf32> to vector<32x256xf32>
    %96 = arith.addf %94, %95 : vector<32x256xf32>
    %cst_48 = arith.constant 0.318309873 : f32
    %97 = vector.broadcast %cst_48 : f32 to vector<32x256xf32>
    %98 = arith.mulf %96, %97 : vector<32x256xf32>
    %cst_49 = arith.constant 5.000000e-01 : f32
    %99 = vector.broadcast %cst_49 : f32 to vector<32x256xf32>
    %100 = arith.addf %98, %99 : vector<32x256xf32>
    %101 = math.floor %100 : vector<32x256xf32>
    %cst_50 = arith.constant 3.140625 : f32
    %102 = vector.broadcast %cst_50 : f32 to vector<32x256xf32>
    %103 = arith.mulf %101, %102 : vector<32x256xf32>
    %104 = arith.subf %96, %103 : vector<32x256xf32>
    %cst_51 = arith.constant 9.67653584E-4 : f32
    %105 = vector.broadcast %cst_51 : f32 to vector<32x256xf32>
    %106 = arith.mulf %101, %105 : vector<32x256xf32>
    %107 = arith.subf %104, %106 : vector<32x256xf32>
    %108 = arith.fptosi %101 : vector<32x256xf32> to vector<32x256xi32>
    %c1_i32_52 = arith.constant 1 : i32
    %109 = vector.broadcast %c1_i32_52 : i32 to vector<32x256xi32>
    %110 = arith.andi %108, %109 : vector<32x256xi32>
    %c1_i32_53 = arith.constant 1 : i32
    %111 = vector.broadcast %c1_i32_53 : i32 to vector<32x256xi32>
    %112 = arith.cmpi eq, %110, %111 : vector<32x256xi32>
    %cst_54 = arith.constant 0.000000e+00 : f32
    %113 = vector.broadcast %cst_54 : f32 to vector<32x256xf32>
    %114 = arith.subf %113, %107 : vector<32x256xf32>
    %115 = arith.select %112, %114, %107 : vector<32x256xi1>, vector<32x256xf32>
    %116 = arith.mulf %115, %115 : vector<32x256xf32>
    %cst_55 = arith.constant -2.50521079E-8 : f32
    %117 = vector.broadcast %cst_55 : f32 to vector<32x256xf32>
    %118 = arith.mulf %117, %116 : vector<32x256xf32>
    %cst_56 = arith.constant 2.75573188E-6 : f32
    %119 = vector.broadcast %cst_56 : f32 to vector<32x256xf32>
    %120 = arith.addf %118, %119 : vector<32x256xf32>
    %121 = arith.mulf %120, %116 : vector<32x256xf32>
    %cst_57 = arith.constant 1.98412701E-4 : f32
    %122 = vector.broadcast %cst_57 : f32 to vector<32x256xf32>
    %123 = arith.subf %121, %122 : vector<32x256xf32>
    %124 = arith.mulf %123, %116 : vector<32x256xf32>
    %cst_58 = arith.constant 0.00833333377 : f32
    %125 = vector.broadcast %cst_58 : f32 to vector<32x256xf32>
    %126 = arith.addf %124, %125 : vector<32x256xf32>
    %127 = arith.mulf %126, %116 : vector<32x256xf32>
    %cst_59 = arith.constant 0.166666672 : f32
    %128 = vector.broadcast %cst_59 : f32 to vector<32x256xf32>
    %129 = arith.subf %127, %128 : vector<32x256xf32>
    %130 = arith.mulf %116, %129 : vector<32x256xf32>
    %131 = arith.mulf %115, %130 : vector<32x256xf32>
    %132 = arith.addf %115, %131 : vector<32x256xf32>
    %cst_60 = arith.constant dense<0.000000e+00> : vector<32x256xf32>
    %133 = tpu.matmul %92, %132, %cst_60 {dimension_numbers = #tpu.dot_dimension_numbers<[1], [0], [0], [1], [0, 0, 1, 1], [], []>} : vector<32x32xf32>, vector<32x256xf32>, vector<32x256xf32> -> vector<32x256xf32>
    %134 = vector.broadcast %93 : vector<32x1xf32> to vector<32x256xf32>
    %135 = arith.addf %133, %134 : vector<32x256xf32>
    %cst_61 = arith.constant 0.318309873 : f32
    %136 = vector.broadcast %cst_61 : f32 to vector<32x256xf32>
    %137 = arith.mulf %135, %136 : vector<32x256xf32>
    %cst_62 = arith.constant 5.000000e-01 : f32
    %138 = vector.broadcast %cst_62 : f32 to vector<32x256xf32>
    %139 = arith.addf %137, %138 : vector<32x256xf32>
    %140 = math.floor %139 : vector<32x256xf32>
    %cst_63 = arith.constant 3.140625 : f32
    %141 = vector.broadcast %cst_63 : f32 to vector<32x256xf32>
    %142 = arith.mulf %140, %141 : vector<32x256xf32>
    %143 = arith.subf %135, %142 : vector<32x256xf32>
    %cst_64 = arith.constant 9.67653584E-4 : f32
    %144 = vector.broadcast %cst_64 : f32 to vector<32x256xf32>
    %145 = arith.mulf %140, %144 : vector<32x256xf32>
    %146 = arith.subf %143, %145 : vector<32x256xf32>
    %147 = arith.fptosi %140 : vector<32x256xf32> to vector<32x256xi32>
    %c1_i32_65 = arith.constant 1 : i32
    %148 = vector.broadcast %c1_i32_65 : i32 to vector<32x256xi32>
    %149 = arith.andi %147, %148 : vector<32x256xi32>
    %c1_i32_66 = arith.constant 1 : i32
    %150 = vector.broadcast %c1_i32_66 : i32 to vector<32x256xi32>
    %151 = arith.cmpi eq, %149, %150 : vector<32x256xi32>
    %cst_67 = arith.constant 0.000000e+00 : f32
    %152 = vector.broadcast %cst_67 : f32 to vector<32x256xf32>
    %153 = arith.subf %152, %146 : vector<32x256xf32>
    %154 = arith.select %151, %153, %146 : vector<32x256xi1>, vector<32x256xf32>
    %155 = arith.mulf %154, %154 : vector<32x256xf32>
    %cst_68 = arith.constant -2.50521079E-8 : f32
    %156 = vector.broadcast %cst_68 : f32 to vector<32x256xf32>
    %157 = arith.mulf %156, %155 : vector<32x256xf32>
    %cst_69 = arith.constant 2.75573188E-6 : f32
    %158 = vector.broadcast %cst_69 : f32 to vector<32x256xf32>
    %159 = arith.addf %157, %158 : vector<32x256xf32>
    %160 = arith.mulf %159, %155 : vector<32x256xf32>
    %cst_70 = arith.constant 1.98412701E-4 : f32
    %161 = vector.broadcast %cst_70 : f32 to vector<32x256xf32>
    %162 = arith.subf %160, %161 : vector<32x256xf32>
    %163 = arith.mulf %162, %155 : vector<32x256xf32>
    %cst_71 = arith.constant 0.00833333377 : f32
    %164 = vector.broadcast %cst_71 : f32 to vector<32x256xf32>
    %165 = arith.addf %163, %164 : vector<32x256xf32>
    %166 = arith.mulf %165, %155 : vector<32x256xf32>
    %cst_72 = arith.constant 0.166666672 : f32
    %167 = vector.broadcast %cst_72 : f32 to vector<32x256xf32>
    %168 = arith.subf %166, %167 : vector<32x256xf32>
    %169 = arith.mulf %155, %168 : vector<32x256xf32>
    %170 = arith.mulf %154, %169 : vector<32x256xf32>
    %171 = arith.addf %154, %170 : vector<32x256xf32>
    %172 = arith.addf %89, %171 : vector<32x256xf32>
    %c0_73 = arith.constant 0 : index
    %c0_74 = arith.constant 0 : index
    %173 = vector.load %arg13[%c0_73, %c0_74] : memref<1x32xf32, #tpu.memory_space<vmem>>, vector<1x32xf32>
    %cst_75 = arith.constant dense<0.000000e+00> : vector<1x256xf32>
    %174 = tpu.matmul %173, %172, %cst_75 {dimension_numbers = #tpu.dot_dimension_numbers<[1], [0], [0], [1], [0, 0, 1, 1], [], []>} : vector<1x32xf32>, vector<32x256xf32>, vector<1x256xf32> -> vector<1x256xf32>
    %c0_76 = arith.constant 0 : index
    %c0_77 = arith.constant 0 : index
    %175 = vector.load %arg14[%c0_76, %c0_77] : memref<1x1xf32, #tpu.memory_space<vmem>>, vector<1x1xf32>
    %176 = vector.broadcast %175 : vector<1x1xf32> to vector<1x256xf32>
    %177 = arith.addf %174, %176 : vector<1x256xf32>
    %c0_78 = arith.constant 0 : index
    %c0_79 = arith.constant 0 : index
    %c0_80 = arith.constant 0 : index
    %178 = vector.load %arg15[%c0_78, %c0_79, %c0_80] : memref<1x1x256xf32, #tpu.memory_space<vmem>>, vector<1x1x256xf32>
    %179 = vector.shape_cast %178 : vector<1x1x256xf32> to vector<1x256xf32>
    %180 = vector.shape_cast %177 : vector<1x256xf32> to vector<1x1x256xf32>
    tpu.vector_store %arg15[%c0_78, %c0_79, %c0_80], %180 {strides = array<i32>} : memref<1x1x256xf32, #tpu.memory_space<vmem>>, vector<1x1x256xf32>,
    return
  }
  func.func @transform_0(%arg0: i32, %arg1: i32) -> (i32, i32, i32) {
    %c0_i32 = arith.constant 0 : i32
    %c0_i32_0 = arith.constant 0 : i32
    return %arg0, %c0_i32, %arg1 : i32, i32, i32
  }
  func.func @transform_1(%arg0: i32, %arg1: i32) -> (i32, i32) {
    %c0_i32 = arith.constant 0 : i32
    %c0_i32_0 = arith.constant 0 : i32
    %c0_i32_1 = arith.constant 0 : i32
    return %c0_i32, %c0_i32_0 : i32, i32
  }
  func.func @transform_2(%arg0: i32, %arg1: i32) -> (i32, i32) {
    %c0_i32 = arith.constant 0 : i32
    %c0_i32_0 = arith.constant 0 : i32
    %c0_i32_1 = arith.constant 0 : i32
    return %c0_i32, %c0_i32_0 : i32, i32
  }
  func.func @transform_3(%arg0: i32, %arg1: i32) -> (i32, i32) {
    %c0_i32 = arith.constant 0 : i32
    %c0_i32_0 = arith.constant 0 : i32
    %c0_i32_1 = arith.constant 0 : i32
    return %c0_i32, %c0_i32_0 : i32, i32
  }
  func.func @transform_4(%arg0: i32, %arg1: i32) -> (i32, i32) {
    %c0_i32 = arith.constant 0 : i32
    %c0_i32_0 = arith.constant 0 : i32
    %c0_i32_1 = arith.constant 0 : i32
    return %c0_i32, %c0_i32_0 : i32, i32
  }
  func.func @transform_5(%arg0: i32, %arg1: i32) -> (i32, i32) {
    %c0_i32 = arith.constant 0 : i32
    %c0_i32_0 = arith.constant 0 : i32
    %c0_i32_1 = arith.constant 0 : i32
    return %c0_i32, %c0_i32_0 : i32, i32
  }
  func.func @transform_6(%arg0: i32, %arg1: i32) -> (i32, i32) {
    %c0_i32 = arith.constant 0 : i32
    %c0_i32_0 = arith.constant 0 : i32
    %c0_i32_1 = arith.constant 0 : i32
    return %c0_i32, %c0_i32_0 : i32, i32
  }
  func.func @transform_7(%arg0: i32, %arg1: i32) -> (i32, i32) {
    %c0_i32 = arith.constant 0 : i32
    %c0_i32_0 = arith.constant 0 : i32
    %c0_i32_1 = arith.constant 0 : i32
    return %c0_i32, %c0_i32_0 : i32, i32
  }
  func.func @transform_8(%arg0: i32, %arg1: i32) -> (i32, i32) {
    %c0_i32 = arith.constant 0 : i32
    %c0_i32_0 = arith.constant 0 : i32
    %c0_i32_1 = arith.constant 0 : i32
    return %c0_i32, %c0_i32_0 : i32, i32
  }
  func.func @transform_9(%arg0: i32, %arg1: i32) -> (i32, i32) {
    %c0_i32 = arith.constant 0 : i32
    %c0_i32_0 = arith.constant 0 : i32
    %c0_i32_1 = arith.constant 0 : i32
    return %c0_i32, %c0_i32_0 : i32, i32
  }
  func.func @transform_10(%arg0: i32, %arg1: i32) -> (i32, i32) {
    %c0_i32 = arith.constant 0 : i32
    %c0_i32_0 = arith.constant 0 : i32
    %c0_i32_1 = arith.constant 0 : i32
    return %c0_i32, %c0_i32_0 : i32, i32
  }
  func.func @transform_11(%arg0: i32, %arg1: i32) -> (i32, i32) {
    %c0_i32 = arith.constant 0 : i32
    %c0_i32_0 = arith.constant 0 : i32
    %c0_i32_1 = arith.constant 0 : i32
    return %c0_i32, %c0_i32_0 : i32, i32
  }
  func.func @transform_12(%arg0: i32, %arg1: i32) -> (i32, i32) {
    %c0_i32 = arith.constant 0 : i32
    %c0_i32_0 = arith.constant 0 : i32
    %c0_i32_1 = arith.constant 0 : i32
    return %c0_i32, %c0_i32_0 : i32, i32
  }
  func.func @transform_13(%arg0: i32, %arg1: i32) -> (i32, i32, i32) {
    %c0_i32 = arith.constant 0 : i32
    %c0_i32_0 = arith.constant 0 : i32
    return %arg0, %c0_i32, %arg1 : i32, i32, i32
  }
}

</mosaic_0001>

<llo_original>
// kernel: fcnet_forward.1
$region0: #{fcnet_forward.1}
  #allocation0 [shape = 'u32[]', space=smem, size = 0x4, offset = 0x4, fixed_abs, tag = 'smem constant byte address 0x4 - core index']
  #allocation1 [shape = 'u32[144,128]{1,0:T(1,128)}', space=vmem, size = 0x12000, scoped, tag = 'internal scratch']
  #allocation2 [shape = 'f32[1,1]{1,0:T(1,128)S(1)}', space=vmem, size = 0x200, scoped, tag = 'scoped memory for fcnet_forward.1']
  %s0 = inlined_call_operand.vmem [shape: f32[2,4,256], index: 0, kind: input, shape index: {}]
  %s1 = inlined_call_operand.vmem [shape: f32[32,4], index: 1, kind: input, shape index: {}]
  %s2 = inlined_call_operand.vmem [shape: f32[32,1], index: 2, kind: input, shape index: {}]
  %s3 = inlined_call_operand.vmem [shape: f32[32,4], index: 3, kind: input, shape index: {}]
  %s4 = inlined_call_operand.vmem [shape: f32[32,1], index: 4, kind: input, shape index: {}]
  %s5 = inlined_call_operand.vmem [shape: f32[32,32], index: 5, kind: input, shape index: {}]
  %s6 = inlined_call_operand.vmem [shape: f32[32,1], index: 6, kind: input, shape index: {}]
  %s7 = inlined_call_operand.vmem [shape: f32[32,32], index: 7, kind: input, shape index: {}]
  %s8 = inlined_call_operand.vmem [shape: f32[32,1], index: 8, kind: input, shape index: {}]
  %s9 = inlined_call_operand.vmem [shape: f32[32,32], index: 9, kind: input, shape index: {}]
  %s10 = inlined_call_operand.vmem [shape: f32[32,1], index: 10, kind: input, shape index: {}]
  %s11 = inlined_call_operand.vmem [shape: f32[1,32], index: 11, kind: input, shape index: {}]
  %s12 = inlined_call_operand.<no memory space> [shape: f32[1,1], index: 12, kind: input, shape index: {}]
  %s13 = inlined_call_operand.vmem [shape: f32[2,1,256], index: 13, kind: output, shape index: {}]
  %s14 = sld [smem:[#allocation0]]
  $region85: #{fcnet_forward.1} parent=0
    _
  %s16 = ssub.s32 1, %s14
  %s17 = scalar_select 0, %s16, %s14
  %v18 = vstv %s12
  %19 = vst [vmem:[#allocation2] sm:$0x1] %v18
  loop: start=0, step=1, limit=4
  $region2: #{fcnet_forward.1} parent=0 // loop_pre_header
    _
  $region3: #{fcnet_forward.1} parent=0 // loop_header
    %s21 = sphi 0, %s25
    %p22 = scmp.ge.s32.totalorder %s21, 4
    %s28 = sphi 0, %s40
    %s29 = sphi 0, %s36
    %s30 = sphi 0, %s28
    %s31 = sphi 0, %s29
    %s32 = sphi 0, %s30
    %s33 = sphi 0, %s31
    %s45 = sphi 0, %s47
    %s48 = sphi 0, %s45
    %s49 = sphi 0, %s48
    %s65 = sphi 0, %s49
    %s69 = sphi 0, %s69
    %s71 = sphi 0, %s69
    %s72 = sphi 0, %s71
    %s86 = sphi 0, %s72
    %s90 = sphi 0, %s90
    %s92 = sphi 0, %s90
    %s93 = sphi 0, %s92
    %s107 = sphi 0, %s93
    %s111 = sphi 0, %s111
    %s113 = sphi 0, %s111
    %s114 = sphi 0, %s113
    %s128 = sphi 0, %s114
    %s132 = sphi 0, %s132
    %s134 = sphi 0, %s132
    %s135 = sphi 0, %s134
    %s149 = sphi 0, %s135
    %s153 = sphi 0, %s153
    %s155 = sphi 0, %s153
    %s156 = sphi 0, %s155
    %s170 = sphi 0, %s156
    %s174 = sphi 0, %s174
    %s176 = sphi 0, %s174
    %s177 = sphi 0, %s176
    %s191 = sphi 0, %s177
    %s195 = sphi 0, %s195
    %s197 = sphi 0, %s195
    %s198 = sphi 0, %s197
    %s212 = sphi 0, %s198
    %s216 = sphi 0, %s216
    %s218 = sphi 0, %s216
    %s219 = sphi 0, %s218
    %s233 = sphi 0, %s219
    %s237 = sphi 0, %s237
    %s239 = sphi 0, %s237
    %s240 = sphi 0, %s239
    %s254 = sphi 0, %s240
    %s258 = sphi 0, %s258
    %s260 = sphi 0, %s258
    %s261 = sphi 0, %s260
    %s275 = sphi 0, %s261
    %s279 = sphi 0, %s279
    %s281 = sphi 0, %s279
    %s282 = sphi 0, %s281
    %s296 = sphi 0, %s282
    %s300 = sphi 0, %s300
    %s302 = sphi 0, %s300
    %s303 = sphi 0, %s302
    %s317 = sphi 0, %s303
    %s325 = sphi 0, %s327
    %s328 = sphi 0, %s325
    %s329 = sphi 0, %s328
    %s345 = sphi 0, %s329
  $region4: #{fcnet_forward.1} parent=0 // loop_header_branch
    %24 = sbr.rel (%p22) target = $region8
  $region5: #{fcnet_forward.1} parent=0 // loop_body
    %s26 = ssub.s32 %s21, 1
    %s27 = ssub.s32 %s21, 2
    %s34 = sadd.s32 1, %s29
    %p35 = scmp.ge.s32.totalorder %s34, 1
    %s36 = scalar_select %p35, 0, %s34
    %s37 = sadd.s32 1, %s28
    %s38 = scalar_select %p35, %s37, %s28
    %p39 = scmp.ge.s32.totalorder %s38, 2
    %s40 = scalar_select %p39, 0, %s38
    %s41 = ssub.s32 %s28, %s40
    %s42 = ssub.s32 %s29, %s36
    %s43 = sor.u32 %s41, %s42
    %p44 = scmp.eq.s32.totalorder %s43, 0
    %s46 = sadd.s32 %s45, 1
    %s47 = scalar_select %p44, %s45, %s46
    %p50 = pneg %p44
    %p51 = scmp.eq.s32.totalorder %s21, 1
    %p52 = por %p50, %p51
    %p53 = scmp.ne.s32.totalorder %s45, %s48
    %p54 = scmp.eq.s32.totalorder %s21, 0
    %p55 = por %p53, %p54
    %p56 = scmp.ne.s32.totalorder %s45, %s48
    %p57 = scmp.eq.s32.totalorder %s26, 1
    %p58 = por %p56, %p57
    %p59 = scmp.ne.s32.totalorder %s48, %s49
    %p60 = scmp.eq.s32.totalorder %s26, 0
    %p61 = por %p59, %p60
    %p62 = scmp.ne.s32.totalorder %s48, %s49
    %p63 = scmp.eq.s32.totalorder %s27, 1
    %p64 = por %p62, %p63
    %p66 = scmp.ne.s32.totalorder %s49, %s65
    %p67 = scmp.eq.s32.totalorder %s27, 0
    %p68 = por %p66, %p67
    %s70 = sadd.s32 %s69, 1
    %p73 = scmp.eq.s32.totalorder %s21, 1
    %p74 = scmp.ne.s32.totalorder %s69, %s71
    %p75 = scmp.eq.s32.totalorder %s21, 0
    %p76 = por %p74, %p75
    %p77 = scmp.ne.s32.totalorder %s69, %s71
    %p78 = scmp.eq.s32.totalorder %s26, 1
    %p79 = por %p77, %p78
    %p80 = scmp.ne.s32.totalorder %s71, %s72
    %p81 = scmp.eq.s32.totalorder %s26, 0
    %p82 = por %p80, %p81
    %p83 = scmp.ne.s32.totalorder %s71, %s72
    %p84 = scmp.eq.s32.totalorder %s27, 1
    %p85 = por %p83, %p84
    %p87 = scmp.ne.s32.totalorder %s72, %s86
    %p88 = scmp.eq.s32.totalorder %s27, 0
    %p89 = por %p87, %p88
    %s91 = sadd.s32 %s90, 1
    %p94 = scmp.eq.s32.totalorder %s21, 1
    %p95 = scmp.ne.s32.totalorder %s90, %s92
    %p96 = scmp.eq.s32.totalorder %s21, 0
    %p97 = por %p95, %p96
    %p98 = scmp.ne.s32.totalorder %s90, %s92
    %p99 = scmp.eq.s32.totalorder %s26, 1
    %p100 = por %p98, %p99
    %p101 = scmp.ne.s32.totalorder %s92, %s93
    %p102 = scmp.eq.s32.totalorder %s26, 0
    %p103 = por %p101, %p102
    %p104 = scmp.ne.s32.totalorder %s92, %s93
    %p105 = scmp.eq.s32.totalorder %s27, 1
    %p106 = por %p104, %p105
    %p108 = scmp.ne.s32.totalorder %s93, %s107
    %p109 = scmp.eq.s32.totalorder %s27, 0
    %p110 = por %p108, %p109
    %s112 = sadd.s32 %s111, 1
    %p115 = scmp.eq.s32.totalorder %s21, 1
    %p116 = scmp.ne.s32.totalorder %s111, %s113
    %p117 = scmp.eq.s32.totalorder %s21, 0
    %p118 = por %p116, %p117
    %p119 = scmp.ne.s32.totalorder %s111, %s113
    %p120 = scmp.eq.s32.totalorder %s26, 1
    %p121 = por %p119, %p120
    %p122 = scmp.ne.s32.totalorder %s113, %s114
    %p123 = scmp.eq.s32.totalorder %s26, 0
    %p124 = por %p122, %p123
    %p125 = scmp.ne.s32.totalorder %s113, %s114
    %p126 = scmp.eq.s32.totalorder %s27, 1
    %p127 = por %p125, %p126
    %p129 = scmp.ne.s32.totalorder %s114, %s128
    %p130 = scmp.eq.s32.totalorder %s27, 0
    %p131 = por %p129, %p130
    %s133 = sadd.s32 %s132, 1
    %p136 = scmp.eq.s32.totalorder %s21, 1
    %p137 = scmp.ne.s32.totalorder %s132, %s134
    %p138 = scmp.eq.s32.totalorder %s21, 0
    %p139 = por %p137, %p138
    %p140 = scmp.ne.s32.totalorder %s132, %s134
    %p141 = scmp.eq.s32.totalorder %s26, 1
    %p142 = por %p140, %p141
    %p143 = scmp.ne.s32.totalorder %s134, %s135
    %p144 = scmp.eq.s32.totalorder %s26, 0
    %p145 = por %p143, %p144
    %p146 = scmp.ne.s32.totalorder %s134, %s135
    %p147 = scmp.eq.s32.totalorder %s27, 1
    %p148 = por %p146, %p147
    %p150 = scmp.ne.s32.totalorder %s135, %s149
    %p151 = scmp.eq.s32.totalorder %s27, 0
    %p152 = por %p150, %p151
    %s154 = sadd.s32 %s153, 1
    %p157 = scmp.eq.s32.totalorder %s21, 1
    %p158 = scmp.ne.s32.totalorder %s153, %s155
    %p159 = scmp.eq.s32.totalorder %s21, 0
    %p160 = por %p158, %p159
    %p161 = scmp.ne.s32.totalorder %s153, %s155
    %p162 = scmp.eq.s32.totalorder %s26, 1
    %p163 = por %p161, %p162
    %p164 = scmp.ne.s32.totalorder %s155, %s156
    %p165 = scmp.eq.s32.totalorder %s26, 0
    %p166 = por %p164, %p165
    %p167 = scmp.ne.s32.totalorder %s155, %s156
    %p168 = scmp.eq.s32.totalorder %s27, 1
    %p169 = por %p167, %p168
    %p171 = scmp.ne.s32.totalorder %s156, %s170
    %p172 = scmp.eq.s32.totalorder %s27, 0
    %p173 = por %p171, %p172
    %s175 = sadd.s32 %s174, 1
    %p178 = scmp.eq.s32.totalorder %s21, 1
    %p179 = scmp.ne.s32.totalorder %s174, %s176
    %p180 = scmp.eq.s32.totalorder %s21, 0
    %p181 = por %p179, %p180
    %p182 = scmp.ne.s32.totalorder %s174, %s176
    %p183 = scmp.eq.s32.totalorder %s26, 1
    %p184 = por %p182, %p183
    %p185 = scmp.ne.s32.totalorder %s176, %s177
    %p186 = scmp.eq.s32.totalorder %s26, 0
    %p187 = por %p185, %p186
    %p188 = scmp.ne.s32.totalorder %s176, %s177
    %p189 = scmp.eq.s32.totalorder %s27, 1
    %p190 = por %p188, %p189
    %p192 = scmp.ne.s32.totalorder %s177, %s191
    %p193 = scmp.eq.s32.totalorder %s27, 0
    %p194 = por %p192, %p193
    %s196 = sadd.s32 %s195, 1
    %p199 = scmp.eq.s32.totalorder %s21, 1
    %p200 = scmp.ne.s32.totalorder %s195, %s197
    %p201 = scmp.eq.s32.totalorder %s21, 0
    %p202 = por %p200, %p201
    %p203 = scmp.ne.s32.totalorder %s195, %s197
    %p204 = scmp.eq.s32.totalorder %s26, 1
    %p205 = por %p203, %p204
    %p206 = scmp.ne.s32.totalorder %s197, %s198
    %p207 = scmp.eq.s32.totalorder %s26, 0
    %p208 = por %p206, %p207
    %p209 = scmp.ne.s32.totalorder %s197, %s198
    %p210 = scmp.eq.s32.totalorder %s27, 1
    %p211 = por %p209, %p210
    %p213 = scmp.ne.s32.totalorder %s198, %s212
    %p214 = scmp.eq.s32.totalorder %s27, 0
    %p215 = por %p213, %p214
    %s217 = sadd.s32 %s216, 1
    %p220 = scmp.eq.s32.totalorder %s21, 1
    %p221 = scmp.ne.s32.totalorder %s216, %s218
    %p222 = scmp.eq.s32.totalorder %s21, 0
    %p223 = por %p221, %p222
    %p224 = scmp.ne.s32.totalorder %s216, %s218
    %p225 = scmp.eq.s32.totalorder %s26, 1
    %p226 = por %p224, %p225
    %p227 = scmp.ne.s32.totalorder %s218, %s219
    %p228 = scmp.eq.s32.totalorder %s26, 0
    %p229 = por %p227, %p228
    %p230 = scmp.ne.s32.totalorder %s218, %s219
    %p231 = scmp.eq.s32.totalorder %s27, 1
    %p232 = por %p230, %p231
    %p234 = scmp.ne.s32.totalorder %s219, %s233
    %p235 = scmp.eq.s32.totalorder %s27, 0
    %p236 = por %p234, %p235
    %s238 = sadd.s32 %s237, 1
    %p241 = scmp.eq.s32.totalorder %s21, 1
    %p242 = scmp.ne.s32.totalorder %s237, %s239
    %p243 = scmp.eq.s32.totalorder %s21, 0
    %p244 = por %p242, %p243
    %p245 = scmp.ne.s32.totalorder %s237, %s239
    %p246 = scmp.eq.s32.totalorder %s26, 1
    %p247 = por %p245, %p246
    %p248 = scmp.ne.s32.totalorder %s239, %s240
    %p249 = scmp.eq.s32.totalorder %s26, 0
    %p250 = por %p248, %p249
    %p251 = scmp.ne.s32.totalorder %s239, %s240
    %p252 = scmp.eq.s32.totalorder %s27, 1
    %p253 = por %p251, %p252
    %p255 = scmp.ne.s32.totalorder %s240, %s254
    %p256 = scmp.eq.s32.totalorder %s27, 0
    %p257 = por %p255, %p256
    %s259 = sadd.s32 %s258, 1
    %p262 = scmp.eq.s32.totalorder %s21, 1
    %p263 = scmp.ne.s32.totalorder %s258, %s260
    %p264 = scmp.eq.s32.totalorder %s21, 0
    %p265 = por %p263, %p264
    %p266 = scmp.ne.s32.totalorder %s258, %s260
    %p267 = scmp.eq.s32.totalorder %s26, 1
    %p268 = por %p266, %p267
    %p269 = scmp.ne.s32.totalorder %s260, %s261
    %p270 = scmp.eq.s32.totalorder %s26, 0
    %p271 = por %p269, %p270
    %p272 = scmp.ne.s32.totalorder %s260, %s261
    %p273 = scmp.eq.s32.totalorder %s27, 1
    %p274 = por %p272, %p273
    %p276 = scmp.ne.s32.totalorder %s261, %s275
    %p277 = scmp.eq.s32.totalorder %s27, 0
    %p278 = por %p276, %p277
    %s280 = sadd.s32 %s279, 1
    %p283 = scmp.eq.s32.totalorder %s21, 1
    %p284 = scmp.ne.s32.totalorder %s279, %s281
    %p285 = scmp.eq.s32.totalorder %s21, 0
    %p286 = por %p284, %p285
    %p287 = scmp.ne.s32.totalorder %s279, %s281
    %p288 = scmp.eq.s32.totalorder %s26, 1
    %p289 = por %p287, %p288
    %p290 = scmp.ne.s32.totalorder %s281, %s282
    %p291 = scmp.eq.s32.totalorder %s26, 0
    %p292 = por %p290, %p291
    %p293 = scmp.ne.s32.totalorder %s281, %s282
    %p294 = scmp.eq.s32.totalorder %s27, 1
    %p295 = por %p293, %p294
    %p297 = scmp.ne.s32.totalorder %s282, %s296
    %p298 = scmp.eq.s32.totalorder %s27, 0
    %p299 = por %p297, %p298
    %s301 = sadd.s32 %s300, 1
    %p304 = scmp.eq.s32.totalorder %s21, 1
    %p305 = scmp.ne.s32.totalorder %s300, %s302
    %p306 = scmp.eq.s32.totalorder %s21, 0
    %p307 = por %p305, %p306
    %p308 = scmp.ne.s32.totalorder %s300, %s302
    %p309 = scmp.eq.s32.totalorder %s26, 1
    %p310 = por %p308, %p309
    %p311 = scmp.ne.s32.totalorder %s302, %s303
    %p312 = scmp.eq.s32.totalorder %s26, 0
    %p313 = por %p311, %p312
    %p314 = scmp.ne.s32.totalorder %s302, %s303
    %p315 = scmp.eq.s32.totalorder %s27, 1
    %p316 = por %p314, %p315
    %p318 = scmp.ne.s32.totalorder %s303, %s317
    %p319 = scmp.eq.s32.totalorder %s27, 0
    %p320 = por %p318, %p319
    %s321 = ssub.s32 %s28, %s40
    %s322 = ssub.s32 %s29, %s36
    %s323 = sor.u32 %s321, %s322
    %p324 = scmp.eq.s32.totalorder %s323, 0
    %s326 = sadd.s32 %s325, 1
    %s327 = scalar_select %p324, %s325, %s326
    %p330 = pneg %p324
    %p331 = scmp.eq.s32.totalorder %s21, 1
    %p332 = por %p330, %p331
    %p333 = scmp.ne.s32.totalorder %s325, %s328
    %p334 = scmp.eq.s32.totalorder %s21, 0
    %p335 = por %p333, %p334
    %p336 = scmp.ne.s32.totalorder %s325, %s328
    %p337 = scmp.eq.s32.totalorder %s26, 1
    %p338 = por %p336, %p337
    %p339 = scmp.ne.s32.totalorder %s328, %s329
    %p340 = scmp.eq.s32.totalorder %s26, 0
    %p341 = por %p339, %p340
    %p342 = scmp.ne.s32.totalorder %s328, %s329
    %p343 = scmp.eq.s32.totalorder %s27, 1
    %p344 = por %p342, %p343
    %p346 = scmp.ne.s32.totalorder %s329, %s345
    %p347 = scmp.eq.s32.totalorder %s27, 0
    %p348 = por %p346, %p347
    %p349 = scmp.le.s32.totalorder 1, %s21
    %p350 = scmp.lt.s32.totalorder %s21, 3
    %p351 = pnand %p349, %p350
    %p352 = pneg %p351
    // Predicated region
    $region9: #{fcnet_forward.1} parent=5 // pred_check
      _
    $region10: #{fcnet_forward.1} parent=5 // pred_check_branch
      %354 = sbr.rel (%p351) target = $region12
    $region11: #{fcnet_forward.1} parent=5 // pred_region
      %s355 = ssub.s32 %s21, 1
      // Predicated region
      $region13: #{fcnet_forward.1} parent=11 // pred_check
        %p356 = pneg %p82
      $region14: #{fcnet_forward.1} parent=11 // pred_check_branch
        %358 = sbr.rel (%p356) target = $region16
      $region15: #{fcnet_forward.1} parent=11 // pred_region
        _
      $region16: #{fcnet_forward.1} parent=11 // pred_fallthru
        _
      // Predicated region
      $region17: #{fcnet_forward.1} parent=11 // pred_check
        %p359 = pneg %p103
      $region18: #{fcnet_forward.1} parent=11 // pred_check_branch
        %361 = sbr.rel (%p359) target = $region20
      $region19: #{fcnet_forward.1} parent=11 // pred_region
        _
      $region20: #{fcnet_forward.1} parent=11 // pred_fallthru
        _
      // Predicated region
      $region21: #{fcnet_forward.1} parent=11 // pred_check
        %p362 = pneg %p124
      $region22: #{fcnet_forward.1} parent=11 // pred_check_branch
        %364 = sbr.rel (%p362) target = $region24
      $region23: #{fcnet_forward.1} parent=11 // pred_region
        _
      $region24: #{fcnet_forward.1} parent=11 // pred_fallthru
        _
      // Predicated region
      $region25: #{fcnet_forward.1} parent=11 // pred_check
        %p365 = pneg %p145
      $region26: #{fcnet_forward.1} parent=11 // pred_check_branch
        %367 = sbr.rel (%p365) target = $region28
      $region27: #{fcnet_forward.1} parent=11 // pred_region
        _
      $region28: #{fcnet_forward.1} parent=11 // pred_fallthru
        _
      // Predicated region
      $region29: #{fcnet_forward.1} parent=11 // pred_check
        %p368 = pneg %p166
      $region30: #{fcnet_forward.1} parent=11 // pred_check_branch
        %370 = sbr.rel (%p368) target = $region32
      $region31: #{fcnet_forward.1} parent=11 // pred_region
        _
      $region32: #{fcnet_forward.1} parent=11 // pred_fallthru
        _
      // Predicated region
      $region33: #{fcnet_forward.1} parent=11 // pred_check
        %p371 = pneg %p187
      $region34: #{fcnet_forward.1} parent=11 // pred_check_branch
        %373 = sbr.rel (%p371) target = $region36
      $region35: #{fcnet_forward.1} parent=11 // pred_region
        _
      $region36: #{fcnet_forward.1} parent=11 // pred_fallthru
        _
      // Predicated region
      $region37: #{fcnet_forward.1} parent=11 // pred_check
        %p374 = pneg %p208
      $region38: #{fcnet_forward.1} parent=11 // pred_check_branch
        %376 = sbr.rel (%p374) target = $region40
      $region39: #{fcnet_forward.1} parent=11 // pred_region
        _
      $region40: #{fcnet_forward.1} parent=11 // pred_fallthru
        _
      // Predicated region
      $region41: #{fcnet_forward.1} parent=11 // pred_check
        %p377 = pneg %p229
      $region42: #{fcnet_forward.1} parent=11 // pred_check_branch
        %379 = sbr.rel (%p377) target = $region44
      $region43: #{fcnet_forward.1} parent=11 // pred_region
        _
      $region44: #{fcnet_forward.1} parent=11 // pred_fallthru
        _
      // Predicated region
      $region45: #{fcnet_forward.1} parent=11 // pred_check
        %p380 = pneg %p250
      $region46: #{fcnet_forward.1} parent=11 // pred_check_branch
        %382 = sbr.rel (%p380) target = $region48
      $region47: #{fcnet_forward.1} parent=11 // pred_region
        _
      $region48: #{fcnet_forward.1} parent=11 // pred_fallthru
        _
      // Predicated region
      $region49: #{fcnet_forward.1} parent=11 // pred_check
        %p383 = pneg %p271
      $region50: #{fcnet_forward.1} parent=11 // pred_check_branch
        %385 = sbr.rel (%p383) target = $region52
      $region51: #{fcnet_forward.1} parent=11 // pred_region
        _
      $region52: #{fcnet_forward.1} parent=11 // pred_fallthru
        _
      // Predicated region
      $region53: #{fcnet_forward.1} parent=11 // pred_check
        %p386 = pneg %p292
      $region54: #{fcnet_forward.1} parent=11 // pred_check_branch
        %388 = sbr.rel (%p386) target = $region56
      $region55: #{fcnet_forward.1} parent=11 // pred_region
        _
      $region56: #{fcnet_forward.1} parent=11 // pred_fallthru
        _
      // Predicated region
      $region57: #{fcnet_forward.1} parent=11 // pred_check
        %p389 = pneg %p313
      $region58: #{fcnet_forward.1} parent=11 // pred_check_branch
        %391 = sbr.rel (%p389) target = $region60
      $region59: #{fcnet_forward.1} parent=11 // pred_region
        _
      $region60: #{fcnet_forward.1} parent=11 // pred_fallthru
        _
    $region12: #{fcnet_forward.1} parent=5 // pred_fallthru
      _
    %p392 = scmp.lt.s32.totalorder %s21, 2
    // Predicated region
    $region61: #{fcnet_forward.1} parent=5 // pred_check
      %p393 = pneg %p392
    $region62: #{fcnet_forward.1} parent=5 // pred_check_branch
      %395 = sbr.rel (%p393) target = $region64
    $region63: #{fcnet_forward.1} parent=5 // pred_region
      // Predicated region
      $region65: #{fcnet_forward.1} parent=63 // pred_check
        %p396 = pneg %p55
      $region66: #{fcnet_forward.1} parent=63 // pred_check_branch
        %398 = sbr.rel (%p396) target = $region68
      $region67: #{fcnet_forward.1} parent=63 // pred_region
        %s399 = smul.u32 2, %s29
        %p400 = scmp.lt.s32.totalorder %s28, 1
        %s401 = scalar_select %p400, %s28, 1
        %p402 = scmp.lt.s32.totalorder %s399, 1
        %s403 = scalar_select %p402, %s399, 1
        %s404 = smul.addr %s401, 2
        %s405 = sadd.s32 %s403, %s404
        %s406 = smul.addr %s405, 4
        %s407 = scalar_lea.vmem %s0, %s406
        %s408 = smul.u32 2, %s29
      $region68: #{fcnet_forward.1} parent=63 // pred_fallthru
        _
    $region64: #{fcnet_forward.1} parent=5 // pred_fallthru
      _
    %p409 = scmp.le.s32.totalorder 1, %s21
    %p410 = scmp.lt.s32.totalorder %s21, 3
    %p411 = pnand %p409, %p410
    %p412 = pneg %p411
    // Predicated region
    $region69: #{fcnet_forward.1} parent=5 // pred_check
      _
    $region70: #{fcnet_forward.1} parent=5 // pred_check_branch
      %414 = sbr.rel (%p411) target = $region72
    $region71: #{fcnet_forward.1} parent=5 // pred_region
      %s415 = ssub.s32 %s21, 1
      %s416 = smul.u32 2, %s31
      %p417 = scmp.lt.s32.totalorder %s30, 1
      %s418 = scalar_select %p417, %s30, 1
      %p419 = scmp.lt.s32.totalorder %s416, 1
      %s420 = scalar_select %p419, %s416, 1
      %s421 = smul.addr %s418, 2
      %s422 = sadd.s32 %s420, %s421
      %s423 = smul.addr %s422, 4
      %s424 = scalar_lea.vmem %s0, %s423
      %p425 = pneg %p61
      %p426 = pneg %p58
      %p427 = pneg %p82
      %p428 = pneg %p79
      %p429 = pneg %p103
      %p430 = pneg %p100
      %p431 = pneg %p124
      %p432 = pneg %p121
      %p433 = pneg %p145
      %p434 = pneg %p142
      %p435 = pneg %p166
      %p436 = pneg %p163
      %p437 = pneg %p187
      %p438 = pneg %p184
      %p439 = pneg %p208
      %p440 = pneg %p205
      %p441 = pneg %p229
      %p442 = pneg %p226
      %p443 = pneg %p250
      %p444 = pneg %p247
      %p445 = pneg %p271
      %p446 = pneg %p268
      %p447 = pneg %p292
      %p448 = pneg %p289
      %p449 = pneg %p313
      %p450 = pneg %p310
      %p451 = pneg %p341
      %p452 = pneg %p338
      %s453 = smul.u32 2, %s31
      %p454 = scmp.lt.s32.totalorder %s30, 1
      %s455 = scalar_select %p454, %s30, 1
      %p456 = scmp.lt.s32.totalorder %s453, 1
      %s457 = scalar_select %p456, %s453, 1
      %s458 = smul.addr %s455, 2
      %s459 = sadd.s32 %s457, %s458
      %s460 = scalar_lea.vmem %s13, %s459
      %s461 = smul.u32 2, %s31
      %p462 = scmp.lt.s32.totalorder %s30, 1
      %s463 = scalar_select %p462, %s30, 1
      %p464 = scmp.lt.s32.totalorder %s461, 1
      %s465 = scalar_select %p464, %s461, 1
      %s466 = smul.addr %s463, 2
      %s467 = sadd.s32 %s465, %s466
      %s468 = smul.addr %s467, 4
      %s469 = scalar_lea.vmem %s0, %s468
      %s470 = smul.u32 2, %s31
      %s471 = smul.u32 2, %s31
      %p472 = scmp.lt.s32.totalorder %s30, 1
      %s473 = scalar_select %p472, %s30, 1
      %p474 = scmp.lt.s32.totalorder %s471, 1
      %s475 = scalar_select %p474, %s471, 1
      %s476 = smul.addr %s473, 2
      %s477 = sadd.s32 %s475, %s476
      %s478 = scalar_lea.vmem %s13, %s477
      %s479 = smul.u32 2, %s31
      %v480 = vld [vmem:[%s469] sm:$0xff]
      %v481 = vld [vmem:[%s1] sm:$0xff]
      %v482 = vld [vmem:[%s1 + $0x8] sm:$0xff]
      %v483 = vld [vmem:[%s1 + $0x10] sm:$0xff]
      %v484 = vld [vmem:[%s1 + $0x18] sm:$0xff]
      %v485 = vld [vmem:[%s2] sm:$0xff]
      %v486 = vld [vmem:[%s2 + $0x8] sm:$0xff]
      %v487 = vld [vmem:[%s2 + $0x10] sm:$0xff]
      %v488 = vld [vmem:[%s2 + $0x18] sm:$0xff]
      %490 = vset.pattern.permute.xlu0 0
      %491 = vperm.xlu0 %490, %v485
      %v492 = vpop.permute.xlu0 %491
      %495 = vset.pattern.permute.xlu0 0
      %496 = vperm.xlu0 %495, %v486
      %v497 = vpop.permute.xlu0 %496
      %500 = vset.pattern.permute.xlu0 0
      %501 = vperm.xlu0 %500, %v487
      %v502 = vpop.permute.xlu0 %501
      %505 = vset.pattern.permute.xlu0 0
      %506 = vperm.xlu0 %505, %v488
      %v507 = vpop.permute.xlu0 %506
      %v510 = vcombine.high %v480, %v480
      %vm511 = vcmask 31744
      %v513 = vsel %vm511, %v481, 0
      %v516 = vsel %vm511, %v482, 0
      %v519 = vsel %vm511, %v483, 0
      %v522 = vsel %vm511, %v484, 0
      %vm524 = vcmask 1043456
      %v525 = vsel %vm524, %v480, 0
      %v527 = vsel %vm524, %v510, 0
      %529 = vmatprep.subr.mxu0 %v527
      %530 = vmatpush1.msra.mxu0 %v525
      %531 = vmatprep.subr.mxu0 0.0
      %532 = vmatpush1.msra.mxu0 0.0
      %533 = vmatprep.subr.mxu0 0.0
      %534 = vmatpush1.msra.mxu0 0.0
      %535 = vmatprep.subr.mxu0 0.0
      %536 = vmatpush1.msra.mxu0 0.0
      %537 = vmatprep.subr.mxu0 0.0
      %538 = vmatpush1.msra.mxu0 0.0
      %539 = vmatprep.subr.mxu0 0.0
      %540 = vmatpush1.msra.mxu0 0.0
      %541 = vmatprep.subr.mxu0 0.0
      %542 = vmatpush1.msra.mxu0 0.0
      %543 = vmatprep.subr.mxu0 0.0
      %544 = vmatpush1.msra.mxu0 0.0
      %545 = vmatprep.subr.mxu0 0.0
      %546 = vmatpush1.msra.mxu0 0.0
      %547 = vmatprep.subr.mxu0 0.0
      %548 = vmatpush1.msra.mxu0 0.0
      %549 = vmatprep.subr.mxu0 0.0
      %550 = vmatpush1.msra.mxu0 0.0
      %551 = vmatprep.subr.mxu0 0.0
      %552 = vmatpush1.msra.mxu0 0.0
      %553 = vmatprep.subr.mxu0 0.0
      %554 = vmatpush1.msra.mxu0 0.0
      %555 = vmatprep.subr.mxu0 0.0
      %556 = vmatpush1.msra.mxu0 0.0
      %557 = vmatprep.subr.mxu0 0.0
      %558 = vmatpush1.msra.mxu0 0.0
      %559 = vmatprep.subr.mxu0 0.0
      %560 = vmatpush1.msra.mxu0 0.0
      %561 = vmatprep.subr.mxu0 0.0
      %562 = vmatpush1.msra.mxu0 0.0
      %563 = vmatprep.subr.mxu0 0.0
      %564 = vmatpush1.msra.mxu0 0.0
      %565 = vmatprep.subr.mxu0 0.0
      %566 = vmatpush1.msra.mxu0 0.0
      %567 = vmatprep.subr.mxu0 0.0
      %568 = vmatpush1.msra.mxu0 0.0
      %569 = vmatprep.subr.mxu0 0.0
      %570 = vmatpush1.msra.mxu0 0.0
      %571 = vmatprep.subr.mxu0 0.0
      %572 = vmatpush1.msra.mxu0 0.0
      %573 = vmatprep.subr.mxu0 0.0
      %574 = vmatpush1.msra.mxu0 0.0
      %575 = vmatprep.subr.mxu0 0.0
      %576 = vmatpush1.msra.mxu0 0.0
      %577 = vmatprep.subr.mxu0 0.0
      %578 = vmatpush1.msra.mxu0 0.0
      %579 = vmatprep.subr.mxu0 0.0
      %580 = vmatpush1.msra.mxu0 0.0
      %581 = vmatprep.subr.mxu0 0.0
      %582 = vmatpush1.msra.mxu0 0.0
      %583 = vmatprep.subr.mxu0 0.0
      %584 = vmatpush1.msra.mxu0 0.0
      %585 = vmatprep.subr.mxu0 0.0
      %586 = vmatpush1.msra.mxu0 0.0
      %587 = vmatprep.subr.mxu0 0.0
      %588 = vmatpush1.msra.mxu0 0.0
      %589 = vmatprep.subr.mxu0 0.0
      %590 = vmatpush1.msra.mxu0 0.0
      %591 = vmatprep.subr.mxu0 0.0
      %592 = vmatpush1.msra.mxu0 0.0
      %593 = vmatprep.mubr.f32.mxu0 0.0
      %594 = vmatmul.mubr.f32.gmra.mrb[0].mxu0 %v513
      %v595 = vpop.f32.mrb[0].mxu0
      %v596 = vadd.f32 %v492, %v595
      %v597 = vpop.f32.mrb[0].mxu0
      %v598 = vadd.f32 %v492, %v597
      %599 = vmatprep.mubr.f32.mxu0 0.0
      %600 = vmatmul.mubr.f32.gmra.mrb[0].mxu0 %v516
      %v601 = vpop.f32.mrb[0].mxu0
      %v602 = vadd.f32 %v497, %v601
      %v603 = vpop.f32.mrb[0].mxu0
      %v604 = vadd.f32 %v497, %v603
      %605 = vmatprep.mubr.f32.mxu0 0.0
      %606 = vmatmul.mubr.f32.gmra.mrb[0].mxu0 %v519
      %v607 = vpop.f32.mrb[0].mxu0
      %v608 = vadd.f32 %v502, %v607
      %v609 = vpop.f32.mrb[0].mxu0
      %v610 = vadd.f32 %v502, %v609
      %611 = vmatprep.mubr.f32.mxu0 0.0
      %612 = vmatmul.mubr.f32.gmra.mrb[0].mxu0 %v522
      %v613 = vpop.f32.mrb[0].mxu0
      %v614 = vadd.f32 %v507, %v613
      %v615 = vpop.f32.mrb[0].mxu0
      %v616 = vadd.f32 %v507, %v615
      %617 = vdwg.mxu0
      %v618 = vld [vmem:[%s3] sm:$0xff]
      %v619 = vld [vmem:[%s3 + $0x8] sm:$0xff]
      %v620 = vld [vmem:[%s3 + $0x10] sm:$0xff]
      %v621 = vld [vmem:[%s3 + $0x18] sm:$0xff]
      %v622 = vld [vmem:[%s4] sm:$0xff]
      %v623 = vld [vmem:[%s4 + $0x8] sm:$0xff]
      %v624 = vld [vmem:[%s4 + $0x10] sm:$0xff]
      %v625 = vld [vmem:[%s4 + $0x18] sm:$0xff]
      %v626 = vld [vmem:[%s5] sm:$0xff]
      %v627 = vld [vmem:[%s5 + $0x8] sm:$0xff]
      %v628 = vld [vmem:[%s5 + $0x10] sm:$0xff]
      %v629 = vld [vmem:[%s5 + $0x18] sm:$0xff]
      %v630 = vld [vmem:[%s6] sm:$0xff]
      %v631 = vld [vmem:[%s6 + $0x8] sm:$0xff]
      %v632 = vld [vmem:[%s6 + $0x10] sm:$0xff]
      %v633 = vld [vmem:[%s6 + $0x18] sm:$0xff]
      %635 = vset.pattern.permute.xlu0 0
      %636 = vperm.xlu0 %635, %v622
      %v637 = vpop.permute.xlu0 %636
      %640 = vset.pattern.permute.xlu0 0
      %641 = vperm.xlu0 %640, %v623
      %v642 = vpop.permute.xlu0 %641
      %645 = vset.pattern.permute.xlu0 0
      %646 = vperm.xlu0 %645, %v624
      %v647 = vpop.permute.xlu0 %646
      %650 = vset.pattern.permute.xlu0 0
      %651 = vperm.xlu0 %650, %v625
      %v652 = vpop.permute.xlu0 %651
      %v655 = vsel %vm511, %v618, 0
      %v658 = vsel %vm511, %v619, 0
      %v661 = vsel %vm511, %v620, 0
      %v664 = vsel %vm511, %v621, 0
      %666 = vmatprep.subr.mxu0 %v527
      %667 = vmatpush1.msra.mxu0 %v525
      %668 = vmatprep.subr.mxu0 0.0
      %669 = vmatpush1.msra.mxu0 0.0
      %670 = vmatprep.subr.mxu0 0.0
      %671 = vmatpush1.msra.mxu0 0.0
      %672 = vmatprep.subr.mxu0 0.0
      %673 = vmatpush1.msra.mxu0 0.0
      %674 = vmatprep.subr.mxu0 0.0
      %675 = vmatpush1.msra.mxu0 0.0
      %676 = vmatprep.subr.mxu0 0.0
      %677 = vmatpush1.msra.mxu0 0.0
      %678 = vmatprep.subr.mxu0 0.0
      %679 = vmatpush1.msra.mxu0 0.0
      %680 = vmatprep.subr.mxu0 0.0
      %681 = vmatpush1.msra.mxu0 0.0
      %682 = vmatprep.subr.mxu0 0.0
      %683 = vmatpush1.msra.mxu0 0.0
      %684 = vmatprep.subr.mxu0 0.0
      %685 = vmatpush1.msra.mxu0 0.0
      %686 = vmatprep.subr.mxu0 0.0
      %687 = vmatpush1.msra.mxu0 0.0
      %688 = vmatprep.subr.mxu0 0.0
      %689 = vmatpush1.msra.mxu0 0.0
      %690 = vmatprep.subr.mxu0 0.0
      %691 = vmatpush1.msra.mxu0 0.0
      %692 = vmatprep.subr.mxu0 0.0
      %693 = vmatpush1.msra.mxu0 0.0
      %694 = vmatprep.subr.mxu0 0.0
      %695 = vmatpush1.msra.mxu0 0.0
      %696 = vmatprep.subr.mxu0 0.0
      %697 = vmatpush1.msra.mxu0 0.0
      %698 = vmatprep.subr.mxu0 0.0
      %699 = vmatpush1.msra.mxu0 0.0
      %700 = vmatprep.subr.mxu0 0.0
      %701 = vmatpush1.msra.mxu0 0.0
      %702 = vmatprep.subr.mxu0 0.0
      %703 = vmatpush1.msra.mxu0 0.0
      %704 = vmatprep.subr.mxu0 0.0
      %705 = vmatpush1.msra.mxu0 0.0
      %706 = vmatprep.subr.mxu0 0.0
      %707 = vmatpush1.msra.mxu0 0.0
      %708 = vmatprep.subr.mxu0 0.0
      %709 = vmatpush1.msra.mxu0 0.0
      %710 = vmatprep.subr.mxu0 0.0
      %711 = vmatpush1.msra.mxu0 0.0
      %712 = vmatprep.subr.mxu0 0.0
      %713 = vmatpush1.msra.mxu0 0.0
      %714 = vmatprep.subr.mxu0 0.0
      %715 = vmatpush1.msra.mxu0 0.0
      %716 = vmatprep.subr.mxu0 0.0
      %717 = vmatpush1.msra.mxu0 0.0
      %718 = vmatprep.subr.mxu0 0.0
      %719 = vmatpush1.msra.mxu0 0.0
      %720 = vmatprep.subr.mxu0 0.0
      %721 = vmatpush1.msra.mxu0 0.0
      %722 = vmatprep.subr.mxu0 0.0
      %723 = vmatpush1.msra.mxu0 0.0
      %724 = vmatprep.subr.mxu0 0.0
      %725 = vmatpush1.msra.mxu0 0.0
      %726 = vmatprep.subr.mxu0 0.0
      %727 = vmatpush1.msra.mxu0 0.0
      %728 = vmatprep.subr.mxu0 0.0
      %729 = vmatpush1.msra.mxu0 0.0
      %730 = vmatprep.mubr.f32.mxu0 0.0
      %731 = vmatmul.mubr.f32.gmra.mrb[0].mxu0 %v655
      %v732 = vpop.f32.mrb[0].mxu0
      %v733 = vadd.f32 %v637, %v732
      %v734 = vpop.f32.mrb[0].mxu0
      %v735 = vadd.f32 %v637, %v734
      %736 = vmatprep.mubr.f32.mxu0 0.0
      %737 = vmatmul.mubr.f32.gmra.mrb[0].mxu0 %v658
      %v738 = vpop.f32.mrb[0].mxu0
      %v739 = vadd.f32 %v642, %v738
      %v740 = vpop.f32.mrb[0].mxu0
      %v741 = vadd.f32 %v642, %v740
      %742 = vmatprep.mubr.f32.mxu0 0.0
      %743 = vmatmul.mubr.f32.gmra.mrb[0].mxu0 %v661
      %v744 = vpop.f32.mrb[0].mxu0
      %v745 = vadd.f32 %v647, %v744
      %v746 = vpop.f32.mrb[0].mxu0
      %v747 = vadd.f32 %v647, %v746
      %748 = vmatprep.mubr.f32.mxu0 0.0
      %749 = vmatmul.mubr.f32.gmra.mrb[0].mxu0 %v664
      %v750 = vpop.f32.mrb[0].mxu0
      %v751 = vadd.f32 %v652, %v750
      %v752 = vpop.f32.mrb[0].mxu0
      %v753 = vadd.f32 %v652, %v752
      %754 = vdwg.mxu0
      %v755 = vmul.f32 %v733, 0.31830987
      %v756 = vmul.f32 %v735, 0.31830987
      %v757 = vmul.f32 %v739, 0.31830987
      %v758 = vmul.f32 %v741, 0.31830987
      %v759 = vmul.f32 %v745, 0.31830987
      %v760 = vmul.f32 %v747, 0.31830987
      %v761 = vmul.f32 %v751, 0.31830987
      %v762 = vmul.f32 %v753, 0.31830987
      %v763 = vadd.f32 %v755, 0.5
      %v764 = vadd.f32 %v756, 0.5
      %v765 = vadd.f32 %v757, 0.5
      %v766 = vadd.f32 %v758, 0.5
      %v767 = vadd.f32 %v759, 0.5
      %v768 = vadd.f32 %v760, 0.5
      %v769 = vadd.f32 %v761, 0.5
      %v770 = vadd.f32 %v762, 0.5
      %v771 = vfloor.f32 %v763
      %v772 = vfloor.f32 %v764
      %v773 = vfloor.f32 %v765
      %v774 = vfloor.f32 %v766
      %v775 = vfloor.f32 %v767
      %v776 = vfloor.f32 %v768
      %v777 = vfloor.f32 %v769
      %v778 = vfloor.f32 %v770
      %v779 = vmul.f32 %v771, 3.140625
      %v780 = vmul.f32 %v772, 3.140625
      %v781 = vmul.f32 %v773, 3.140625
      %v782 = vmul.f32 %v774, 3.140625
      %v783 = vmul.f32 %v775, 3.140625
      %v784 = vmul.f32 %v776, 3.140625
      %v785 = vmul.f32 %v777, 3.140625
      %v786 = vmul.f32 %v778, 3.140625
      %v787 = vsub.f32 %v733, %v779
      %v788 = vsub.f32 %v735, %v780
      %v789 = vsub.f32 %v739, %v781
      %v790 = vsub.f32 %v741, %v782
      %v791 = vsub.f32 %v745, %v783
      %v792 = vsub.f32 %v747, %v784
      %v793 = vsub.f32 %v751, %v785
      %v794 = vsub.f32 %v753, %v786
      %v795 = vmul.f32 %v771, 0.0009676536
      %v796 = vmul.f32 %v772, 0.0009676536
      %v797 = vmul.f32 %v773, 0.0009676536
      %v798 = vmul.f32 %v774, 0.0009676536
      %v799 = vmul.f32 %v775, 0.0009676536
      %v800 = vmul.f32 %v776, 0.0009676536
      %v801 = vmul.f32 %v777, 0.0009676536
      %v802 = vmul.f32 %v778, 0.0009676536
      %v803 = vsub.f32 %v787, %v795
      %v804 = vsub.f32 %v788, %v796
      %v805 = vsub.f32 %v789, %v797
      %v806 = vsub.f32 %v790, %v798
      %v807 = vsub.f32 %v791, %v799
      %v808 = vsub.f32 %v792, %v800
      %v809 = vsub.f32 %v793, %v801
      %v810 = vsub.f32 %v794, %v802
      %v811 = vcvt.f32.s32.to.zero.pseudo %v771
      %v812 = vcvt.f32.s32.to.zero.pseudo %v772
      %v813 = vcvt.f32.s32.to.zero.pseudo %v773
      %v814 = vcvt.f32.s32.to.zero.pseudo %v774
      %v815 = vcvt.f32.s32.to.zero.pseudo %v775
      %v816 = vcvt.f32.s32.to.zero.pseudo %v776
      %v817 = vcvt.f32.s32.to.zero.pseudo %v777
      %v818 = vcvt.f32.s32.to.zero.pseudo %v778
      %v819 = vand.u32 %v811, 1
      %v820 = vand.u32 %v812, 1
      %v821 = vand.u32 %v813, 1
      %v822 = vand.u32 %v814, 1
      %v823 = vand.u32 %v815, 1
      %v824 = vand.u32 %v816, 1
      %v825 = vand.u32 %v817, 1
      %v826 = vand.u32 %v818, 1
      %vm827 = vcmp.eq.s32.totalorder %v819, 1
      %vm828 = vcmp.eq.s32.totalorder %v820, 1
      %vm829 = vcmp.eq.s32.totalorder %v821, 1
      %vm830 = vcmp.eq.s32.totalorder %v822, 1
      %vm831 = vcmp.eq.s32.totalorder %v823, 1
      %vm832 = vcmp.eq.s32.totalorder %v824, 1
      %vm833 = vcmp.eq.s32.totalorder %v825, 1
      %vm834 = vcmp.eq.s32.totalorder %v826, 1
      %v835 = vsub.f32 0.0, %v803
      %v836 = vsub.f32 0.0, %v804
      %v837 = vsub.f32 0.0, %v805
      %v838 = vsub.f32 0.0, %v806
      %v839 = vsub.f32 0.0, %v807
      %v840 = vsub.f32 0.0, %v808
      %v841 = vsub.f32 0.0, %v809
      %v842 = vsub.f32 0.0, %v810
      %v843 = vsel %vm827, %v835, %v803
      %v844 = vsel %vm828, %v836, %v804
      %v845 = vsel %vm829, %v837, %v805
      %v846 = vsel %vm830, %v838, %v806
      %v847 = vsel %vm831, %v839, %v807
      %v848 = vsel %vm832, %v840, %v808
      %v849 = vsel %vm833, %v841, %v809
      %v850 = vsel %vm834, %v842, %v810
      %v851 = vmul.f32 %v843, %v843
      %v852 = vmul.f32 %v844, %v844
      %v853 = vmul.f32 %v845, %v845
      %v854 = vmul.f32 %v846, %v846
      %v855 = vmul.f32 %v847, %v847
      %v856 = vmul.f32 %v848, %v848
      %v857 = vmul.f32 %v849, %v849
      %v858 = vmul.f32 %v850, %v850
      %v859 = vmul.f32 %v851, -2.5052108e-08
      %v860 = vmul.f32 %v852, -2.5052108e-08
      %v861 = vmul.f32 %v853, -2.5052108e-08
      %v862 = vmul.f32 %v854, -2.5052108e-08
      %v863 = vmul.f32 %v855, -2.5052108e-08
      %v864 = vmul.f32 %v856, -2.5052108e-08
      %v865 = vmul.f32 %v857, -2.5052108e-08
      %v866 = vmul.f32 %v858, -2.5052108e-08
      %v867 = vadd.f32 %v859, 2.7557319e-06
      %v868 = vadd.f32 %v860, 2.7557319e-06
      %v869 = vadd.f32 %v861, 2.7557319e-06
      %v870 = vadd.f32 %v862, 2.7557319e-06
      %v871 = vadd.f32 %v863, 2.7557319e-06
      %v872 = vadd.f32 %v864, 2.7557319e-06
      %v873 = vadd.f32 %v865, 2.7557319e-06
      %v874 = vadd.f32 %v866, 2.7557319e-06
      %v875 = vmul.f32 %v867, %v851
      %v876 = vmul.f32 %v868, %v852
      %v877 = vmul.f32 %v869, %v853
      %v878 = vmul.f32 %v870, %v854
      %v879 = vmul.f32 %v871, %v855
      %v880 = vmul.f32 %v872, %v856
      %v881 = vmul.f32 %v873, %v857
      %v882 = vmul.f32 %v874, %v858
      %v883 = vsub.f32 %v875, 0.0001984127
      %v884 = vsub.f32 %v876, 0.0001984127
      %v885 = vsub.f32 %v877, 0.0001984127
      %v886 = vsub.f32 %v878, 0.0001984127
      %v887 = vsub.f32 %v879, 0.0001984127
      %v888 = vsub.f32 %v880, 0.0001984127
      %v889 = vsub.f32 %v881, 0.0001984127
      %v890 = vsub.f32 %v882, 0.0001984127
      %v891 = vmul.f32 %v883, %v851
      %v892 = vmul.f32 %v884, %v852
      %v893 = vmul.f32 %v885, %v853
      %v894 = vmul.f32 %v886, %v854
      %v895 = vmul.f32 %v887, %v855
      %v896 = vmul.f32 %v888, %v856
      %v897 = vmul.f32 %v889, %v857
      %v898 = vmul.f32 %v890, %v858
      %v899 = vadd.f32 %v891, 0.008333334
      %v900 = vadd.f32 %v892, 0.008333334
      %v901 = vadd.f32 %v893, 0.008333334
      %v902 = vadd.f32 %v894, 0.008333334
      %v903 = vadd.f32 %v895, 0.008333334
      %v904 = vadd.f32 %v896, 0.008333334
      %v905 = vadd.f32 %v897, 0.008333334
      %v906 = vadd.f32 %v898, 0.008333334
      %v907 = vmul.f32 %v899, %v851
      %v908 = vmul.f32 %v900, %v852
      %v909 = vmul.f32 %v901, %v853
      %v910 = vmul.f32 %v902, %v854
      %v911 = vmul.f32 %v903, %v855
      %v912 = vmul.f32 %v904, %v856
      %v913 = vmul.f32 %v905, %v857
      %v914 = vmul.f32 %v906, %v858
      %v915 = vsub.f32 %v907, 0.16666667
      %v916 = vsub.f32 %v908, 0.16666667
      %v917 = vsub.f32 %v909, 0.16666667
      %v918 = vsub.f32 %v910, 0.16666667
      %v919 = vsub.f32 %v911, 0.16666667
      %v920 = vsub.f32 %v912, 0.16666667
      %v921 = vsub.f32 %v913, 0.16666667
      %v922 = vsub.f32 %v914, 0.16666667
      %v923 = vmul.f32 %v851, %v915
      %v924 = vmul.f32 %v852, %v916
      %v925 = vmul.f32 %v853, %v917
      %v926 = vmul.f32 %v854, %v918
      %v927 = vmul.f32 %v855, %v919
      %v928 = vmul.f32 %v856, %v920
      %v929 = vmul.f32 %v857, %v921
      %v930 = vmul.f32 %v858, %v922
      %v931 = vmul.f32 %v843, %v923
      %v932 = vmul.f32 %v844, %v924
      %v933 = vmul.f32 %v845, %v925
      %v934 = vmul.f32 %v846, %v926
      %v935 = vmul.f32 %v847, %v927
      %v936 = vmul.f32 %v848, %v928
      %v937 = vmul.f32 %v849, %v929
      %v938 = vmul.f32 %v850, %v930
      %v939 = vadd.f32 %v843, %v931
      %v940 = vadd.f32 %v844, %v932
      %v941 = vadd.f32 %v845, %v933
      %v942 = vadd.f32 %v846, %v934
      %v943 = vadd.f32 %v847, %v935
      %v944 = vadd.f32 %v848, %v936
      %v945 = vadd.f32 %v849, %v937
      %v946 = vadd.f32 %v850, %v938
      %948 = vset.pattern.permute.xlu0 0
      %949 = vperm.xlu0 %948, %v630
      %v950 = vpop.permute.xlu0 %949
      %953 = vset.pattern.permute.xlu0 0
      %954 = vperm.xlu0 %953, %v631
      %v955 = vpop.permute.xlu0 %954
      %958 = vset.pattern.permute.xlu0 0
      %959 = vperm.xlu0 %958, %v632
      %v960 = vpop.permute.xlu0 %959
      %963 = vset.pattern.permute.xlu0 0
      %964 = vperm.xlu0 %963, %v633
      %v965 = vpop.permute.xlu0 %964
      %vm967 = vcmask 261120
      %v969 = vsel %vm967, %v626, 0
      %v972 = vsel %vm967, %v627, 0
      %v975 = vsel %vm967, %v628, 0
      %v978 = vsel %vm967, %v629, 0
      %980 = vmatprep.subr.mxu0 %v940
      %981 = vmatpush1.msra.mxu0 %v939
      %982 = vmatprep.subr.mxu0 %v942
      %983 = vmatpush1.msra.mxu0 %v941
      %984 = vmatprep.subr.mxu0 %v944
      %985 = vmatpush1.msra.mxu0 %v943
      %986 = vmatprep.subr.mxu0 %v946
      %987 = vmatpush1.msra.mxu0 %v945
      %988 = vmatprep.subr.mxu0 0.0
      %989 = vmatpush1.msra.mxu0 0.0
      %990 = vmatprep.subr.mxu0 0.0
      %991 = vmatpush1.msra.mxu0 0.0
      %992 = vmatprep.subr.mxu0 0.0
      %993 = vmatpush1.msra.mxu0 0.0
      %994 = vmatprep.subr.mxu0 0.0
      %995 = vmatpush1.msra.mxu0 0.0
      %996 = vmatprep.subr.mxu0 0.0
      %997 = vmatpush1.msra.mxu0 0.0
      %998 = vmatprep.subr.mxu0 0.0
      %999 = vmatpush1.msra.mxu0 0.0
      %1000 = vmatprep.subr.mxu0 0.0
      %1001 = vmatpush1.msra.mxu0 0.0
      %1002 = vmatprep.subr.mxu0 0.0
      %1003 = vmatpush1.msra.mxu0 0.0
      %1004 = vmatprep.subr.mxu0 0.0
      %1005 = vmatpush1.msra.mxu0 0.0
      %1006 = vmatprep.subr.mxu0 0.0
      %1007 = vmatpush1.msra.mxu0 0.0
      %1008 = vmatprep.subr.mxu0 0.0
      %1009 = vmatpush1.msra.mxu0 0.0
      %1010 = vmatprep.subr.mxu0 0.0
      %1011 = vmatpush1.msra.mxu0 0.0
      %1012 = vmatprep.subr.mxu0 0.0
      %1013 = vmatpush1.msra.mxu0 0.0
      %1014 = vmatprep.subr.mxu0 0.0
      %1015 = vmatpush1.msra.mxu0 0.0
      %1016 = vmatprep.subr.mxu0 0.0
      %1017 = vmatpush1.msra.mxu0 0.0
      %1018 = vmatprep.subr.mxu0 0.0
      %1019 = vmatpush1.msra.mxu0 0.0
      %1020 = vmatprep.subr.mxu0 0.0
      %1021 = vmatpush1.msra.mxu0 0.0
      %1022 = vmatprep.subr.mxu0 0.0
      %1023 = vmatpush1.msra.mxu0 0.0
      %1024 = vmatprep.subr.mxu0 0.0
      %1025 = vmatpush1.msra.mxu0 0.0
      %1026 = vmatprep.subr.mxu0 0.0
      %1027 = vmatpush1.msra.mxu0 0.0
      %1028 = vmatprep.subr.mxu0 0.0
      %1029 = vmatpush1.msra.mxu0 0.0
      %1030 = vmatprep.subr.mxu0 0.0
      %1031 = vmatpush1.msra.mxu0 0.0
      %1032 = vmatprep.subr.mxu0 0.0
      %1033 = vmatpush1.msra.mxu0 0.0
      %1034 = vmatprep.subr.mxu0 0.0
      %1035 = vmatpush1.msra.mxu0 0.0
      %1036 = vmatprep.subr.mxu0 0.0
      %1037 = vmatpush1.msra.mxu0 0.0
      %1038 = vmatprep.subr.mxu0 0.0
      %1039 = vmatpush1.msra.mxu0 0.0
      %1040 = vmatprep.subr.mxu0 0.0
      %1041 = vmatpush1.msra.mxu0 0.0
      %1042 = vmatprep.subr.mxu0 0.0
      %1043 = vmatpush1.msra.mxu0 0.0
      %1044 = vmatprep.mubr.f32.mxu0 0.0
      %1045 = vmatmul.mubr.f32.gmra.mrb[0].mxu0 %v969
      %v1046 = vpop.f32.mrb[0].mxu0
      %v1047 = vadd.f32 %v950, %v1046
      %v1048 = vpop.f32.mrb[0].mxu0
      %v1049 = vadd.f32 %v950, %v1048
      %1050 = vmatprep.mubr.f32.mxu0 0.0
      %1051 = vmatmul.mubr.f32.gmra.mrb[0].mxu0 %v972
      %v1052 = vpop.f32.mrb[0].mxu0
      %v1053 = vadd.f32 %v955, %v1052
      %v1054 = vpop.f32.mrb[0].mxu0
      %v1055 = vadd.f32 %v955, %v1054
      %1056 = vmatprep.mubr.f32.mxu0 0.0
      %1057 = vmatmul.mubr.f32.gmra.mrb[0].mxu0 %v975
      %v1058 = vpop.f32.mrb[0].mxu0
      %v1059 = vadd.f32 %v960, %v1058
      %v1060 = vpop.f32.mrb[0].mxu0
      %v1061 = vadd.f32 %v960, %v1060
      %1062 = vmatprep.mubr.f32.mxu0 0.0
      %1063 = vmatmul.mubr.f32.gmra.mrb[0].mxu0 %v978
      %v1064 = vpop.f32.mrb[0].mxu0
      %v1065 = vadd.f32 %v965, %v1064
      %v1066 = vpop.f32.mrb[0].mxu0
      %v1067 = vadd.f32 %v965, %v1066
      %1068 = vdwg.mxu0
      %v1069 = vmul.f32 %v1047, 0.31830987
      %v1070 = vmul.f32 %v1049, 0.31830987
      %v1071 = vmul.f32 %v1053, 0.31830987
      %v1072 = vmul.f32 %v1055, 0.31830987
      %v1073 = vmul.f32 %v1059, 0.31830987
      %v1074 = vmul.f32 %v1061, 0.31830987
      %v1075 = vmul.f32 %v1065, 0.31830987
      %v1076 = vmul.f32 %v1067, 0.31830987
      %v1077 = vadd.f32 %v1069, 0.5
      %v1078 = vadd.f32 %v1070, 0.5
      %v1079 = vadd.f32 %v1071, 0.5
      %v1080 = vadd.f32 %v1072, 0.5
      %v1081 = vadd.f32 %v1073, 0.5
      %v1082 = vadd.f32 %v1074, 0.5
      %v1083 = vadd.f32 %v1075, 0.5
      %v1084 = vadd.f32 %v1076, 0.5
      %v1085 = vfloor.f32 %v1077
      %v1086 = vfloor.f32 %v1078
      %v1087 = vfloor.f32 %v1079
      %v1088 = vfloor.f32 %v1080
      %v1089 = vfloor.f32 %v1081
      %v1090 = vfloor.f32 %v1082
      %v1091 = vfloor.f32 %v1083
      %v1092 = vfloor.f32 %v1084
      %v1093 = vmul.f32 %v1085, 3.140625
      %v1094 = vmul.f32 %v1086, 3.140625
      %v1095 = vmul.f32 %v1087, 3.140625
      %v1096 = vmul.f32 %v1088, 3.140625
      %v1097 = vmul.f32 %v1089, 3.140625
      %v1098 = vmul.f32 %v1090, 3.140625
      %v1099 = vmul.f32 %v1091, 3.140625
      %v1100 = vmul.f32 %v1092, 3.140625
      %v1101 = vsub.f32 %v1047, %v1093
      %v1102 = vsub.f32 %v1049, %v1094
      %v1103 = vsub.f32 %v1053, %v1095
      %v1104 = vsub.f32 %v1055, %v1096
      %v1105 = vsub.f32 %v1059, %v1097
      %v1106 = vsub.f32 %v1061, %v1098
      %v1107 = vsub.f32 %v1065, %v1099
      %v1108 = vsub.f32 %v1067, %v1100
      %v1109 = vmul.f32 %v1085, 0.0009676536
      %v1110 = vmul.f32 %v1086, 0.0009676536
      %v1111 = vmul.f32 %v1087, 0.0009676536
      %v1112 = vmul.f32 %v1088, 0.0009676536
      %v1113 = vmul.f32 %v1089, 0.0009676536
      %v1114 = vmul.f32 %v1090, 0.0009676536
      %v1115 = vmul.f32 %v1091, 0.0009676536
      %v1116 = vmul.f32 %v1092, 0.0009676536
      %v1117 = vsub.f32 %v1101, %v1109
      %v1118 = vsub.f32 %v1102, %v1110
      %v1119 = vsub.f32 %v1103, %v1111
      %v1120 = vsub.f32 %v1104, %v1112
      %v1121 = vsub.f32 %v1105, %v1113
      %v1122 = vsub.f32 %v1106, %v1114
      %v1123 = vsub.f32 %v1107, %v1115
      %v1124 = vsub.f32 %v1108, %v1116
      %v1125 = vcvt.f32.s32.to.zero.pseudo %v1085
      %v1126 = vcvt.f32.s32.to.zero.pseudo %v1086
      %v1127 = vcvt.f32.s32.to.zero.pseudo %v1087
      %v1128 = vcvt.f32.s32.to.zero.pseudo %v1088
      %v1129 = vcvt.f32.s32.to.zero.pseudo %v1089
      %v1130 = vcvt.f32.s32.to.zero.pseudo %v1090
      %v1131 = vcvt.f32.s32.to.zero.pseudo %v1091
      %v1132 = vcvt.f32.s32.to.zero.pseudo %v1092
      %v1133 = vand.u32 %v1125, 1
      %v1134 = vand.u32 %v1126, 1
      %v1135 = vand.u32 %v1127, 1
      %v1136 = vand.u32 %v1128, 1
      %v1137 = vand.u32 %v1129, 1
      %v1138 = vand.u32 %v1130, 1
      %v1139 = vand.u32 %v1131, 1
      %v1140 = vand.u32 %v1132, 1
      %vm1141 = vcmp.eq.s32.totalorder %v1133, 1
      %vm1142 = vcmp.eq.s32.totalorder %v1134, 1
      %vm1143 = vcmp.eq.s32.totalorder %v1135, 1
      %vm1144 = vcmp.eq.s32.totalorder %v1136, 1
      %vm1145 = vcmp.eq.s32.totalorder %v1137, 1
      %vm1146 = vcmp.eq.s32.totalorder %v1138, 1
      %vm1147 = vcmp.eq.s32.totalorder %v1139, 1
      %vm1148 = vcmp.eq.s32.totalorder %v1140, 1
      %v1149 = vsub.f32 0.0, %v1117
      %v1150 = vsub.f32 0.0, %v1118
      %v1151 = vsub.f32 0.0, %v1119
      %v1152 = vsub.f32 0.0, %v1120
      %v1153 = vsub.f32 0.0, %v1121
      %v1154 = vsub.f32 0.0, %v1122
      %v1155 = vsub.f32 0.0, %v1123
      %v1156 = vsub.f32 0.0, %v1124
      %v1157 = vsel %vm1141, %v1149, %v1117
      %v1158 = vsel %vm1142, %v1150, %v1118
      %v1159 = vsel %vm1143, %v1151, %v1119
      %v1160 = vsel %vm1144, %v1152, %v1120
      %v1161 = vsel %vm1145, %v1153, %v1121
      %v1162 = vsel %vm1146, %v1154, %v1122
      %v1163 = vsel %vm1147, %v1155, %v1123
      %v1164 = vsel %vm1148, %v1156, %v1124
      %v1165 = vmul.f32 %v1157, %v1157
      %v1166 = vmul.f32 %v1158, %v1158
      %v1167 = vmul.f32 %v1159, %v1159
      %v1168 = vmul.f32 %v1160, %v1160
      %v1169 = vmul.f32 %v1161, %v1161
      %v1170 = vmul.f32 %v1162, %v1162
      %v1171 = vmul.f32 %v1163, %v1163
      %v1172 = vmul.f32 %v1164, %v1164
      %v1173 = vmul.f32 %v1165, -2.5052108e-08
      %v1174 = vmul.f32 %v1166, -2.5052108e-08
      %v1175 = vmul.f32 %v1167, -2.5052108e-08
      %v1176 = vmul.f32 %v1168, -2.5052108e-08
      %v1177 = vmul.f32 %v1169, -2.5052108e-08
      %v1178 = vmul.f32 %v1170, -2.5052108e-08
      %v1179 = vmul.f32 %v1171, -2.5052108e-08
      %v1180 = vmul.f32 %v1172, -2.5052108e-08
      %v1181 = vadd.f32 %v1173, 2.7557319e-06
      %v1182 = vadd.f32 %v1174, 2.7557319e-06
      %v1183 = vadd.f32 %v1175, 2.7557319e-06
      %v1184 = vadd.f32 %v1176, 2.7557319e-06
      %v1185 = vadd.f32 %v1177, 2.7557319e-06
      %v1186 = vadd.f32 %v1178, 2.7557319e-06
      %v1187 = vadd.f32 %v1179, 2.7557319e-06
      %v1188 = vadd.f32 %v1180, 2.7557319e-06
      %v1189 = vmul.f32 %v1181, %v1165
      %v1190 = vmul.f32 %v1182, %v1166
      %v1191 = vmul.f32 %v1183, %v1167
      %v1192 = vmul.f32 %v1184, %v1168
      %v1193 = vmul.f32 %v1185, %v1169
      %v1194 = vmul.f32 %v1186, %v1170
      %v1195 = vmul.f32 %v1187, %v1171
      %v1196 = vmul.f32 %v1188, %v1172
      %v1197 = vsub.f32 %v1189, 0.0001984127
      %v1198 = vsub.f32 %v1190, 0.0001984127
      %v1199 = vsub.f32 %v1191, 0.0001984127
      %v1200 = vsub.f32 %v1192, 0.0001984127
      %v1201 = vsub.f32 %v1193, 0.0001984127
      %v1202 = vsub.f32 %v1194, 0.0001984127
      %v1203 = vsub.f32 %v1195, 0.0001984127
      %v1204 = vsub.f32 %v1196, 0.0001984127
      %v1205 = vmul.f32 %v1197, %v1165
      %v1206 = vmul.f32 %v1198, %v1166
      %v1207 = vmul.f32 %v1199, %v1167
      %v1208 = vmul.f32 %v1200, %v1168
      %v1209 = vmul.f32 %v1201, %v1169
      %v1210 = vmul.f32 %v1202, %v1170
      %v1211 = vmul.f32 %v1203, %v1171
      %v1212 = vmul.f32 %v1204, %v1172
      %v1213 = vadd.f32 %v1205, 0.008333334
      %v1214 = vadd.f32 %v1206, 0.008333334
      %v1215 = vadd.f32 %v1207, 0.008333334
      %v1216 = vadd.f32 %v1208, 0.008333334
      %v1217 = vadd.f32 %v1209, 0.008333334
      %v1218 = vadd.f32 %v1210, 0.008333334
      %v1219 = vadd.f32 %v1211, 0.008333334
      %v1220 = vadd.f32 %v1212, 0.008333334
      %v1221 = vmul.f32 %v1213, %v1165
      %v1222 = vmul.f32 %v1214, %v1166
      %v1223 = vmul.f32 %v1215, %v1167
      %v1224 = vmul.f32 %v1216, %v1168
      %v1225 = vmul.f32 %v1217, %v1169
      %v1226 = vmul.f32 %v1218, %v1170
      %v1227 = vmul.f32 %v1219, %v1171
      %v1228 = vmul.f32 %v1220, %v1172
      %v1229 = vsub.f32 %v1221, 0.16666667
      %v1230 = vsub.f32 %v1222, 0.16666667
      %v1231 = vsub.f32 %v1223, 0.16666667
      %v1232 = vsub.f32 %v1224, 0.16666667
      %v1233 = vsub.f32 %v1225, 0.16666667
      %v1234 = vsub.f32 %v1226, 0.16666667
      %v1235 = vsub.f32 %v1227, 0.16666667
      %v1236 = vsub.f32 %v1228, 0.16666667
      %v1237 = vmul.f32 %v1165, %v1229
      %v1238 = vmul.f32 %v1166, %v1230
      %v1239 = vmul.f32 %v1167, %v1231
      %v1240 = vmul.f32 %v1168, %v1232
      %v1241 = vmul.f32 %v1169, %v1233
      %v1242 = vmul.f32 %v1170, %v1234
      %v1243 = vmul.f32 %v1171, %v1235
      %v1244 = vmul.f32 %v1172, %v1236
      %v1245 = vmul.f32 %v1157, %v1237
      %v1246 = vmul.f32 %v1158, %v1238
      %v1247 = vmul.f32 %v1159, %v1239
      %v1248 = vmul.f32 %v1160, %v1240
      %v1249 = vmul.f32 %v1161, %v1241
      %v1250 = vmul.f32 %v1162, %v1242
      %v1251 = vmul.f32 %v1163, %v1243
      %v1252 = vmul.f32 %v1164, %v1244
      %v1253 = vadd.f32 %v1157, %v1245
      %v1254 = vadd.f32 %v1158, %v1246
      %v1255 = vadd.f32 %v1159, %v1247
      %v1256 = vadd.f32 %v1160, %v1248
      %v1257 = vadd.f32 %v1161, %v1249
      %v1258 = vadd.f32 %v1162, %v1250
      %v1259 = vadd.f32 %v1163, %v1251
      %v1260 = vadd.f32 %v1164, %v1252
      %v1261 = vadd.f32 %v596, %v1253
      %v1262 = vadd.f32 %v598, %v1254
      %v1263 = vadd.f32 %v602, %v1255
      %v1264 = vadd.f32 %v604, %v1256
      %v1265 = vadd.f32 %v608, %v1257
      %v1266 = vadd.f32 %v610, %v1258
      %v1267 = vadd.f32 %v614, %v1259
      %v1268 = vadd.f32 %v616, %v1260
      %v1269 = vld [vmem:[%s7] sm:$0xff]
      %v1270 = vld [vmem:[%s7 + $0x8] sm:$0xff]
      %v1271 = vld [vmem:[%s7 + $0x10] sm:$0xff]
      %v1272 = vld [vmem:[%s7 + $0x18] sm:$0xff]
      %v1273 = vld [vmem:[%s8] sm:$0xff]
      %v1274 = vld [vmem:[%s8 + $0x8] sm:$0xff]
      %v1275 = vld [vmem:[%s8 + $0x10] sm:$0xff]
      %v1276 = vld [vmem:[%s8 + $0x18] sm:$0xff]
      %v1277 = vld [vmem:[%s9] sm:$0xff]
      %v1278 = vld [vmem:[%s9 + $0x8] sm:$0xff]
      %v1279 = vld [vmem:[%s9 + $0x10] sm:$0xff]
      %v1280 = vld [vmem:[%s9 + $0x18] sm:$0xff]
      %v1281 = vld [vmem:[%s10] sm:$0xff]
      %v1282 = vld [vmem:[%s10 + $0x8] sm:$0xff]
      %v1283 = vld [vmem:[%s10 + $0x10] sm:$0xff]
      %v1284 = vld [vmem:[%s10 + $0x18] sm:$0xff]
      %1286 = vset.pattern.permute.xlu0 0
      %1287 = vperm.xlu0 %1286, %v1273
      %v1288 = vpop.permute.xlu0 %1287
      %1291 = vset.pattern.permute.xlu0 0
      %1292 = vperm.xlu0 %1291, %v1274
      %v1293 = vpop.permute.xlu0 %1292
      %1296 = vset.pattern.permute.xlu0 0
      %1297 = vperm.xlu0 %1296, %v1275
      %v1298 = vpop.permute.xlu0 %1297
      %1301 = vset.pattern.permute.xlu0 0
      %1302 = vperm.xlu0 %1301, %v1276
      %v1303 = vpop.permute.xlu0 %1302
      %v1306 = vsel %vm967, %v1269, 0
      %v1309 = vsel %vm967, %v1270, 0
      %v1312 = vsel %vm967, %v1271, 0
      %v1315 = vsel %vm967, %v1272, 0
      %1317 = vmatprep.subr.mxu0 %v1262
      %1318 = vmatpush1.msra.mxu0 %v1261
      %1319 = vmatprep.subr.mxu0 %v1264
      %1320 = vmatpush1.msra.mxu0 %v1263
      %1321 = vmatprep.subr.mxu0 %v1266
      %1322 = vmatpush1.msra.mxu0 %v1265
      %1323 = vmatprep.subr.mxu0 %v1268
      %1324 = vmatpush1.msra.mxu0 %v1267
      %1325 = vmatprep.subr.mxu0 0.0
      %1326 = vmatpush1.msra.mxu0 0.0
      %1327 = vmatprep.subr.mxu0 0.0
      %1328 = vmatpush1.msra.mxu0 0.0
      %1329 = vmatprep.subr.mxu0 0.0
      %1330 = vmatpush1.msra.mxu0 0.0
      %1331 = vmatprep.subr.mxu0 0.0
      %1332 = vmatpush1.msra.mxu0 0.0
      %1333 = vmatprep.subr.mxu0 0.0
      %1334 = vmatpush1.msra.mxu0 0.0
      %1335 = vmatprep.subr.mxu0 0.0
      %1336 = vmatpush1.msra.mxu0 0.0
      %1337 = vmatprep.subr.mxu0 0.0
      %1338 = vmatpush1.msra.mxu0 0.0
      %1339 = vmatprep.subr.mxu0 0.0
      %1340 = vmatpush1.msra.mxu0 0.0
      %1341 = vmatprep.subr.mxu0 0.0
      %1342 = vmatpush1.msra.mxu0 0.0
      %1343 = vmatprep.subr.mxu0 0.0
      %1344 = vmatpush1.msra.mxu0 0.0
      %1345 = vmatprep.subr.mxu0 0.0
      %1346 = vmatpush1.msra.mxu0 0.0
      %1347 = vmatprep.subr.mxu0 0.0
      %1348 = vmatpush1.msra.mxu0 0.0
      %1349 = vmatprep.subr.mxu0 0.0
      %1350 = vmatpush1.msra.mxu0 0.0
      %1351 = vmatprep.subr.mxu0 0.0
      %1352 = vmatpush1.msra.mxu0 0.0
      %1353 = vmatprep.subr.mxu0 0.0
      %1354 = vmatpush1.msra.mxu0 0.0
      %1355 = vmatprep.subr.mxu0 0.0
      %1356 = vmatpush1.msra.mxu0 0.0
      %1357 = vmatprep.subr.mxu0 0.0
      %1358 = vmatpush1.msra.mxu0 0.0
      %1359 = vmatprep.subr.mxu0 0.0
      %1360 = vmatpush1.msra.mxu0 0.0
      %1361 = vmatprep.subr.mxu0 0.0
      %1362 = vmatpush1.msra.mxu0 0.0
      %1363 = vmatprep.subr.mxu0 0.0
      %1364 = vmatpush1.msra.mxu0 0.0
      %1365 = vmatprep.subr.mxu0 0.0
      %1366 = vmatpush1.msra.mxu0 0.0
      %1367 = vmatprep.subr.mxu0 0.0
      %1368 = vmatpush1.msra.mxu0 0.0
      %1369 = vmatprep.subr.mxu0 0.0
      %1370 = vmatpush1.msra.mxu0 0.0
      %1371 = vmatprep.subr.mxu0 0.0
      %1372 = vmatpush1.msra.mxu0 0.0
      %1373 = vmatprep.subr.mxu0 0.0
      %1374 = vmatpush1.msra.mxu0 0.0
      %1375 = vmatprep.subr.mxu0 0.0
      %1376 = vmatpush1.msra.mxu0 0.0
      %1377 = vmatprep.subr.mxu0 0.0
      %1378 = vmatpush1.msra.mxu0 0.0
      %1379 = vmatprep.subr.mxu0 0.0
      %1380 = vmatpush1.msra.mxu0 0.0
      %1381 = vmatprep.mubr.f32.mxu0 0.0
      %1382 = vmatmul.mubr.f32.gmra.mrb[0].mxu0 %v1306
      %v1383 = vpop.f32.mrb[0].mxu0
      %v1384 = vadd.f32 %v1288, %v1383
      %v1385 = vpop.f32.mrb[0].mxu0
      %v1386 = vadd.f32 %v1288, %v1385
      %1387 = vmatprep.mubr.f32.mxu0 0.0
      %1388 = vmatmul.mubr.f32.gmra.mrb[0].mxu0 %v1309
      %v1389 = vpop.f32.mrb[0].mxu0
      %v1390 = vadd.f32 %v1293, %v1389
      %v1391 = vpop.f32.mrb[0].mxu0
      %v1392 = vadd.f32 %v1293, %v1391
      %1393 = vmatprep.mubr.f32.mxu0 0.0
      %1394 = vmatmul.mubr.f32.gmra.mrb[0].mxu0 %v1312
      %v1395 = vpop.f32.mrb[0].mxu0
      %v1396 = vadd.f32 %v1298, %v1395
      %v1397 = vpop.f32.mrb[0].mxu0
      %v1398 = vadd.f32 %v1298, %v1397
      %1399 = vmatprep.mubr.f32.mxu0 0.0
      %1400 = vmatmul.mubr.f32.gmra.mrb[0].mxu0 %v1315
      %v1401 = vpop.f32.mrb[0].mxu0
      %v1402 = vadd.f32 %v1303, %v1401
      %v1403 = vpop.f32.mrb[0].mxu0
      %v1404 = vadd.f32 %v1303, %v1403
      %1405 = vdwg.mxu0
      %v1406 = vmul.f32 %v1384, 0.31830987
      %v1407 = vmul.f32 %v1386, 0.31830987
      %v1408 = vmul.f32 %v1390, 0.31830987
      %v1409 = vmul.f32 %v1392, 0.31830987
      %v1410 = vmul.f32 %v1396, 0.31830987
      %v1411 = vmul.f32 %v1398, 0.31830987
      %v1412 = vmul.f32 %v1402, 0.31830987
      %v1413 = vmul.f32 %v1404, 0.31830987
      %v1414 = vadd.f32 %v1406, 0.5
      %v1415 = vadd.f32 %v1407, 0.5
      %v1416 = vadd.f32 %v1408, 0.5
      %v1417 = vadd.f32 %v1409, 0.5
      %v1418 = vadd.f32 %v1410, 0.5
      %v1419 = vadd.f32 %v1411, 0.5
      %v1420 = vadd.f32 %v1412, 0.5
      %v1421 = vadd.f32 %v1413, 0.5
      %v1422 = vfloor.f32 %v1414
      %v1423 = vfloor.f32 %v1415
      %v1424 = vfloor.f32 %v1416
      %v1425 = vfloor.f32 %v1417
      %v1426 = vfloor.f32 %v1418
      %v1427 = vfloor.f32 %v1419
      %v1428 = vfloor.f32 %v1420
      %v1429 = vfloor.f32 %v1421
      %v1430 = vmul.f32 %v1422, 3.140625
      %v1431 = vmul.f32 %v1423, 3.140625
      %v1432 = vmul.f32 %v1424, 3.140625
      %v1433 = vmul.f32 %v1425, 3.140625
      %v1434 = vmul.f32 %v1426, 3.140625
      %v1435 = vmul.f32 %v1427, 3.140625
      %v1436 = vmul.f32 %v1428, 3.140625
      %v1437 = vmul.f32 %v1429, 3.140625
      %v1438 = vsub.f32 %v1384, %v1430
      %v1439 = vsub.f32 %v1386, %v1431
      %v1440 = vsub.f32 %v1390, %v1432
      %v1441 = vsub.f32 %v1392, %v1433
      %v1442 = vsub.f32 %v1396, %v1434
      %v1443 = vsub.f32 %v1398, %v1435
      %v1444 = vsub.f32 %v1402, %v1436
      %v1445 = vsub.f32 %v1404, %v1437
      %v1446 = vmul.f32 %v1422, 0.0009676536
      %v1447 = vmul.f32 %v1423, 0.0009676536
      %v1448 = vmul.f32 %v1424, 0.0009676536
      %v1449 = vmul.f32 %v1425, 0.0009676536
      %v1450 = vmul.f32 %v1426, 0.0009676536
      %v1451 = vmul.f32 %v1427, 0.0009676536
      %v1452 = vmul.f32 %v1428, 0.0009676536
      %v1453 = vmul.f32 %v1429, 0.0009676536
      %v1454 = vsub.f32 %v1438, %v1446
      %v1455 = vsub.f32 %v1439, %v1447
      %v1456 = vsub.f32 %v1440, %v1448
      %v1457 = vsub.f32 %v1441, %v1449
      %v1458 = vsub.f32 %v1442, %v1450
      %v1459 = vsub.f32 %v1443, %v1451
      %v1460 = vsub.f32 %v1444, %v1452
      %v1461 = vsub.f32 %v1445, %v1453
      %v1462 = vcvt.f32.s32.to.zero.pseudo %v1422
      %v1463 = vcvt.f32.s32.to.zero.pseudo %v1423
      %v1464 = vcvt.f32.s32.to.zero.pseudo %v1424
      %v1465 = vcvt.f32.s32.to.zero.pseudo %v1425
      %v1466 = vcvt.f32.s32.to.zero.pseudo %v1426
      %v1467 = vcvt.f32.s32.to.zero.pseudo %v1427
      %v1468 = vcvt.f32.s32.to.zero.pseudo %v1428
      %v1469 = vcvt.f32.s32.to.zero.pseudo %v1429
      %v1470 = vand.u32 %v1462, 1
      %v1471 = vand.u32 %v1463, 1
      %v1472 = vand.u32 %v1464, 1
      %v1473 = vand.u32 %v1465, 1
      %v1474 = vand.u32 %v1466, 1
      %v1475 = vand.u32 %v1467, 1
      %v1476 = vand.u32 %v1468, 1
      %v1477 = vand.u32 %v1469, 1
      %vm1478 = vcmp.eq.s32.totalorder %v1470, 1
      %vm1479 = vcmp.eq.s32.totalorder %v1471, 1
      %vm1480 = vcmp.eq.s32.totalorder %v1472, 1
      %vm1481 = vcmp.eq.s32.totalorder %v1473, 1
      %vm1482 = vcmp.eq.s32.totalorder %v1474, 1
      %vm1483 = vcmp.eq.s32.totalorder %v1475, 1
      %vm1484 = vcmp.eq.s32.totalorder %v1476, 1
      %vm1485 = vcmp.eq.s32.totalorder %v1477, 1
      %v1486 = vsub.f32 0.0, %v1454
      %v1487 = vsub.f32 0.0, %v1455
      %v1488 = vsub.f32 0.0, %v1456
      %v1489 = vsub.f32 0.0, %v1457
      %v1490 = vsub.f32 0.0, %v1458
      %v1491 = vsub.f32 0.0, %v1459
      %v1492 = vsub.f32 0.0, %v1460
      %v1493 = vsub.f32 0.0, %v1461
      %v1494 = vsel %vm1478, %v1486, %v1454
      %v1495 = vsel %vm1479, %v1487, %v1455
      %v1496 = vsel %vm1480, %v1488, %v1456
      %v1497 = vsel %vm1481, %v1489, %v1457
      %v1498 = vsel %vm1482, %v1490, %v1458
      %v1499 = vsel %vm1483, %v1491, %v1459
      %v1500 = vsel %vm1484, %v1492, %v1460
      %v1501 = vsel %vm1485, %v1493, %v1461
      %v1502 = vmul.f32 %v1494, %v1494
      %v1503 = vmul.f32 %v1495, %v1495
      %v1504 = vmul.f32 %v1496, %v1496
      %v1505 = vmul.f32 %v1497, %v1497
      %v1506 = vmul.f32 %v1498, %v1498
      %v1507 = vmul.f32 %v1499, %v1499
      %v1508 = vmul.f32 %v1500, %v1500
      %v1509 = vmul.f32 %v1501, %v1501
      %v1510 = vmul.f32 %v1502, -2.5052108e-08
      %v1511 = vmul.f32 %v1503, -2.5052108e-08
      %v1512 = vmul.f32 %v1504, -2.5052108e-08
      %v1513 = vmul.f32 %v1505, -2.5052108e-08
      %v1514 = vmul.f32 %v1506, -2.5052108e-08
      %v1515 = vmul.f32 %v1507, -2.5052108e-08
      %v1516 = vmul.f32 %v1508, -2.5052108e-08
      %v1517 = vmul.f32 %v1509, -2.5052108e-08
      %v1518 = vadd.f32 %v1510, 2.7557319e-06
      %v1519 = vadd.f32 %v1511, 2.7557319e-06
      %v1520 = vadd.f32 %v1512, 2.7557319e-06
      %v1521 = vadd.f32 %v1513, 2.7557319e-06
      %v1522 = vadd.f32 %v1514, 2.7557319e-06
      %v1523 = vadd.f32 %v1515, 2.7557319e-06
      %v1524 = vadd.f32 %v1516, 2.7557319e-06
      %v1525 = vadd.f32 %v1517, 2.7557319e-06
      %v1526 = vmul.f32 %v1518, %v1502
      %v1527 = vmul.f32 %v1519, %v1503
      %v1528 = vmul.f32 %v1520, %v1504
      %v1529 = vmul.f32 %v1521, %v1505
      %v1530 = vmul.f32 %v1522, %v1506
      %v1531 = vmul.f32 %v1523, %v1507
      %v1532 = vmul.f32 %v1524, %v1508
      %v1533 = vmul.f32 %v1525, %v1509
      %v1534 = vsub.f32 %v1526, 0.0001984127
      %v1535 = vsub.f32 %v1527, 0.0001984127
      %v1536 = vsub.f32 %v1528, 0.0001984127
      %v1537 = vsub.f32 %v1529, 0.0001984127
      %v1538 = vsub.f32 %v1530, 0.0001984127
      %v1539 = vsub.f32 %v1531, 0.0001984127
      %v1540 = vsub.f32 %v1532, 0.0001984127
      %v1541 = vsub.f32 %v1533, 0.0001984127
      %v1542 = vmul.f32 %v1534, %v1502
      %v1543 = vmul.f32 %v1535, %v1503
      %v1544 = vmul.f32 %v1536, %v1504
      %v1545 = vmul.f32 %v1537, %v1505
      %v1546 = vmul.f32 %v1538, %v1506
      %v1547 = vmul.f32 %v1539, %v1507
      %v1548 = vmul.f32 %v1540, %v1508
      %v1549 = vmul.f32 %v1541, %v1509
      %v1550 = vadd.f32 %v1542, 0.008333334
      %v1551 = vadd.f32 %v1543, 0.008333334
      %v1552 = vadd.f32 %v1544, 0.008333334
      %v1553 = vadd.f32 %v1545, 0.008333334
      %v1554 = vadd.f32 %v1546, 0.008333334
      %v1555 = vadd.f32 %v1547, 0.008333334
      %v1556 = vadd.f32 %v1548, 0.008333334
      %v1557 = vadd.f32 %v1549, 0.008333334
      %v1558 = vmul.f32 %v1550, %v1502
      %v1559 = vmul.f32 %v1551, %v1503
      %v1560 = vmul.f32 %v1552, %v1504
      %v1561 = vmul.f32 %v1553, %v1505
      %v1562 = vmul.f32 %v1554, %v1506
      %v1563 = vmul.f32 %v1555, %v1507
      %v1564 = vmul.f32 %v1556, %v1508
      %v1565 = vmul.f32 %v1557, %v1509
      %v1566 = vsub.f32 %v1558, 0.16666667
      %v1567 = vsub.f32 %v1559, 0.16666667
      %v1568 = vsub.f32 %v1560, 0.16666667
      %v1569 = vsub.f32 %v1561, 0.16666667
      %v1570 = vsub.f32 %v1562, 0.16666667
      %v1571 = vsub.f32 %v1563, 0.16666667
      %v1572 = vsub.f32 %v1564, 0.16666667
      %v1573 = vsub.f32 %v1565, 0.16666667
      %v1574 = vmul.f32 %v1502, %v1566
      %v1575 = vmul.f32 %v1503, %v1567
      %v1576 = vmul.f32 %v1504, %v1568
      %v1577 = vmul.f32 %v1505, %v1569
      %v1578 = vmul.f32 %v1506, %v1570
      %v1579 = vmul.f32 %v1507, %v1571
      %v1580 = vmul.f32 %v1508, %v1572
      %v1581 = vmul.f32 %v1509, %v1573
      %v1582 = vmul.f32 %v1494, %v1574
      %v1583 = vmul.f32 %v1495, %v1575
      %v1584 = vmul.f32 %v1496, %v1576
      %v1585 = vmul.f32 %v1497, %v1577
      %v1586 = vmul.f32 %v1498, %v1578
      %v1587 = vmul.f32 %v1499, %v1579
      %v1588 = vmul.f32 %v1500, %v1580
      %v1589 = vmul.f32 %v1501, %v1581
      %v1590 = vadd.f32 %v1494, %v1582
      %v1591 = vadd.f32 %v1495, %v1583
      %v1592 = vadd.f32 %v1496, %v1584
      %v1593 = vadd.f32 %v1497, %v1585
      %v1594 = vadd.f32 %v1498, %v1586
      %v1595 = vadd.f32 %v1499, %v1587
      %v1596 = vadd.f32 %v1500, %v1588
      %v1597 = vadd.f32 %v1501, %v1589
      %1599 = vset.pattern.permute.xlu0 0
      %1600 = vperm.xlu0 %1599, %v1281
      %v1601 = vpop.permute.xlu0 %1600
      %1604 = vset.pattern.permute.xlu0 0
      %1605 = vperm.xlu0 %1604, %v1282
      %v1606 = vpop.permute.xlu0 %1605
      %1609 = vset.pattern.permute.xlu0 0
      %1610 = vperm.xlu0 %1609, %v1283
      %v1611 = vpop.permute.xlu0 %1610
      %1614 = vset.pattern.permute.xlu0 0
      %1615 = vperm.xlu0 %1614, %v1284
      %v1616 = vpop.permute.xlu0 %1615
      %v1619 = vsel %vm967, %v1277, 0
      %v1622 = vsel %vm967, %v1278, 0
      %v1625 = vsel %vm967, %v1279, 0
      %v1628 = vsel %vm967, %v1280, 0
      %1630 = vmatprep.subr.mxu0 %v1591
      %1631 = vmatpush1.msra.mxu0 %v1590
      %1632 = vmatprep.subr.mxu0 %v1593
      %1633 = vmatpush1.msra.mxu0 %v1592
      %1634 = vmatprep.subr.mxu0 %v1595
      %1635 = vmatpush1.msra.mxu0 %v1594
      %1636 = vmatprep.subr.mxu0 %v1597
      %1637 = vmatpush1.msra.mxu0 %v1596
      %1638 = vmatprep.subr.mxu0 0.0
      %1639 = vmatpush1.msra.mxu0 0.0
      %1640 = vmatprep.subr.mxu0 0.0
      %1641 = vmatpush1.msra.mxu0 0.0
      %1642 = vmatprep.subr.mxu0 0.0
      %1643 = vmatpush1.msra.mxu0 0.0
      %1644 = vmatprep.subr.mxu0 0.0
      %1645 = vmatpush1.msra.mxu0 0.0
      %1646 = vmatprep.subr.mxu0 0.0
      %1647 = vmatpush1.msra.mxu0 0.0
      %1648 = vmatprep.subr.mxu0 0.0
      %1649 = vmatpush1.msra.mxu0 0.0
      %1650 = vmatprep.subr.mxu0 0.0
      %1651 = vmatpush1.msra.mxu0 0.0
      %1652 = vmatprep.subr.mxu0 0.0
      %1653 = vmatpush1.msra.mxu0 0.0
      %1654 = vmatprep.subr.mxu0 0.0
      %1655 = vmatpush1.msra.mxu0 0.0
      %1656 = vmatprep.subr.mxu0 0.0
      %1657 = vmatpush1.msra.mxu0 0.0
      %1658 = vmatprep.subr.mxu0 0.0
      %1659 = vmatpush1.msra.mxu0 0.0
      %1660 = vmatprep.subr.mxu0 0.0
      %1661 = vmatpush1.msra.mxu0 0.0
      %1662 = vmatprep.subr.mxu0 0.0
      %1663 = vmatpush1.msra.mxu0 0.0
      %1664 = vmatprep.subr.mxu0 0.0
      %1665 = vmatpush1.msra.mxu0 0.0
      %1666 = vmatprep.subr.mxu0 0.0
      %1667 = vmatpush1.msra.mxu0 0.0
      %1668 = vmatprep.subr.mxu0 0.0
      %1669 = vmatpush1.msra.mxu0 0.0
      %1670 = vmatprep.subr.mxu0 0.0
      %1671 = vmatpush1.msra.mxu0 0.0
      %1672 = vmatprep.subr.mxu0 0.0
      %1673 = vmatpush1.msra.mxu0 0.0
      %1674 = vmatprep.subr.mxu0 0.0
      %1675 = vmatpush1.msra.mxu0 0.0
      %1676 = vmatprep.subr.mxu0 0.0
      %1677 = vmatpush1.msra.mxu0 0.0
      %1678 = vmatprep.subr.mxu0 0.0
      %1679 = vmatpush1.msra.mxu0 0.0
      %1680 = vmatprep.subr.mxu0 0.0
      %1681 = vmatpush1.msra.mxu0 0.0
      %1682 = vmatprep.subr.mxu0 0.0
      %1683 = vmatpush1.msra.mxu0 0.0
      %1684 = vmatprep.subr.mxu0 0.0
      %1685 = vmatpush1.msra.mxu0 0.0
      %1686 = vmatprep.subr.mxu0 0.0
      %1687 = vmatpush1.msra.mxu0 0.0
      %1688 = vmatprep.subr.mxu0 0.0
      %1689 = vmatpush1.msra.mxu0 0.0
      %1690 = vmatprep.subr.mxu0 0.0
      %1691 = vmatpush1.msra.mxu0 0.0
      %1692 = vmatprep.subr.mxu0 0.0
      %1693 = vmatpush1.msra.mxu0 0.0
      %1694 = vmatprep.mubr.f32.mxu0 0.0
      %1695 = vmatmul.mubr.f32.gmra.mrb[0].mxu0 %v1619
      %v1696 = vpop.f32.mrb[0].mxu0
      %v1697 = vadd.f32 %v1601, %v1696
      %v1698 = vpop.f32.mrb[0].mxu0
      %v1699 = vadd.f32 %v1601, %v1698
      %1700 = vmatprep.mubr.f32.mxu0 0.0
      %1701 = vmatmul.mubr.f32.gmra.mrb[0].mxu0 %v1622
      %v1702 = vpop.f32.mrb[0].mxu0
      %v1703 = vadd.f32 %v1606, %v1702
      %v1704 = vpop.f32.mrb[0].mxu0
      %v1705 = vadd.f32 %v1606, %v1704
      %1706 = vmatprep.mubr.f32.mxu0 0.0
      %1707 = vmatmul.mubr.f32.gmra.mrb[0].mxu0 %v1625
      %v1708 = vpop.f32.mrb[0].mxu0
      %v1709 = vadd.f32 %v1611, %v1708
      %v1710 = vpop.f32.mrb[0].mxu0
      %v1711 = vadd.f32 %v1611, %v1710
      %1712 = vmatprep.mubr.f32.mxu0 0.0
      %1713 = vmatmul.mubr.f32.gmra.mrb[0].mxu0 %v1628
      %v1714 = vpop.f32.mrb[0].mxu0
      %v1715 = vadd.f32 %v1616, %v1714
      %v1716 = vpop.f32.mrb[0].mxu0
      %v1717 = vadd.f32 %v1616, %v1716
      %1718 = vdwg.mxu0
      %v1719 = vmul.f32 %v1697, 0.31830987
      %v1720 = vmul.f32 %v1699, 0.31830987
      %v1721 = vmul.f32 %v1703, 0.31830987
      %v1722 = vmul.f32 %v1705, 0.31830987
      %v1723 = vmul.f32 %v1709, 0.31830987
      %v1724 = vmul.f32 %v1711, 0.31830987
      %v1725 = vmul.f32 %v1715, 0.31830987
      %v1726 = vmul.f32 %v1717, 0.31830987
      %v1727 = vadd.f32 %v1719, 0.5
      %v1728 = vadd.f32 %v1720, 0.5
      %v1729 = vadd.f32 %v1721, 0.5
      %v1730 = vadd.f32 %v1722, 0.5
      %v1731 = vadd.f32 %v1723, 0.5
      %v1732 = vadd.f32 %v1724, 0.5
      %v1733 = vadd.f32 %v1725, 0.5
      %v1734 = vadd.f32 %v1726, 0.5
      %v1735 = vfloor.f32 %v1727
      %v1736 = vfloor.f32 %v1728
      %v1737 = vfloor.f32 %v1729
      %v1738 = vfloor.f32 %v1730
      %v1739 = vfloor.f32 %v1731
      %v1740 = vfloor.f32 %v1732
      %v1741 = vfloor.f32 %v1733
      %v1742 = vfloor.f32 %v1734
      %v1743 = vmul.f32 %v1735, 3.140625
      %v1744 = vmul.f32 %v1736, 3.140625
      %v1745 = vmul.f32 %v1737, 3.140625
      %v1746 = vmul.f32 %v1738, 3.140625
      %v1747 = vmul.f32 %v1739, 3.140625
      %v1748 = vmul.f32 %v1740, 3.140625
      %v1749 = vmul.f32 %v1741, 3.140625
      %v1750 = vmul.f32 %v1742, 3.140625
      %v1751 = vsub.f32 %v1697, %v1743
      %v1752 = vsub.f32 %v1699, %v1744
      %v1753 = vsub.f32 %v1703, %v1745
      %v1754 = vsub.f32 %v1705, %v1746
      %v1755 = vsub.f32 %v1709, %v1747
      %v1756 = vsub.f32 %v1711, %v1748
      %v1757 = vsub.f32 %v1715, %v1749
      %v1758 = vsub.f32 %v1717, %v1750
      %v1759 = vmul.f32 %v1735, 0.0009676536
      %v1760 = vmul.f32 %v1736, 0.0009676536
      %v1761 = vmul.f32 %v1737, 0.0009676536
      %v1762 = vmul.f32 %v1738, 0.0009676536
      %v1763 = vmul.f32 %v1739, 0.0009676536
      %v1764 = vmul.f32 %v1740, 0.0009676536
      %v1765 = vmul.f32 %v1741, 0.0009676536
      %v1766 = vmul.f32 %v1742, 0.0009676536
      %v1767 = vsub.f32 %v1751, %v1759
      %v1768 = vsub.f32 %v1752, %v1760
      %v1769 = vsub.f32 %v1753, %v1761
      %v1770 = vsub.f32 %v1754, %v1762
      %v1771 = vsub.f32 %v1755, %v1763
      %v1772 = vsub.f32 %v1756, %v1764
      %v1773 = vsub.f32 %v1757, %v1765
      %v1774 = vsub.f32 %v1758, %v1766
      %v1775 = vcvt.f32.s32.to.zero.pseudo %v1735
      %v1776 = vcvt.f32.s32.to.zero.pseudo %v1736
      %v1777 = vcvt.f32.s32.to.zero.pseudo %v1737
      %v1778 = vcvt.f32.s32.to.zero.pseudo %v1738
      %v1779 = vcvt.f32.s32.to.zero.pseudo %v1739
      %v1780 = vcvt.f32.s32.to.zero.pseudo %v1740
      %v1781 = vcvt.f32.s32.to.zero.pseudo %v1741
      %v1782 = vcvt.f32.s32.to.zero.pseudo %v1742
      %v1783 = vand.u32 %v1775, 1
      %v1784 = vand.u32 %v1776, 1
      %v1785 = vand.u32 %v1777, 1
      %v1786 = vand.u32 %v1778, 1
      %v1787 = vand.u32 %v1779, 1
      %v1788 = vand.u32 %v1780, 1
      %v1789 = vand.u32 %v1781, 1
      %v1790 = vand.u32 %v1782, 1
      %vm1791 = vcmp.eq.s32.totalorder %v1783, 1
      %vm1792 = vcmp.eq.s32.totalorder %v1784, 1
      %vm1793 = vcmp.eq.s32.totalorder %v1785, 1
      %vm1794 = vcmp.eq.s32.totalorder %v1786, 1
      %vm1795 = vcmp.eq.s32.totalorder %v1787, 1
      %vm1796 = vcmp.eq.s32.totalorder %v1788, 1
      %vm1797 = vcmp.eq.s32.totalorder %v1789, 1
      %vm1798 = vcmp.eq.s32.totalorder %v1790, 1
      %v1799 = vsub.f32 0.0, %v1767
      %v1800 = vsub.f32 0.0, %v1768
      %v1801 = vsub.f32 0.0, %v1769
      %v1802 = vsub.f32 0.0, %v1770
      %v1803 = vsub.f32 0.0, %v1771
      %v1804 = vsub.f32 0.0, %v1772
      %v1805 = vsub.f32 0.0, %v1773
      %v1806 = vsub.f32 0.0, %v1774
      %v1807 = vsel %vm1791, %v1799, %v1767
      %v1808 = vsel %vm1792, %v1800, %v1768
      %v1809 = vsel %vm1793, %v1801, %v1769
      %v1810 = vsel %vm1794, %v1802, %v1770
      %v1811 = vsel %vm1795, %v1803, %v1771
      %v1812 = vsel %vm1796, %v1804, %v1772
      %v1813 = vsel %vm1797, %v1805, %v1773
      %v1814 = vsel %vm1798, %v1806, %v1774
      %v1815 = vmul.f32 %v1807, %v1807
      %v1816 = vmul.f32 %v1808, %v1808
      %v1817 = vmul.f32 %v1809, %v1809
      %v1818 = vmul.f32 %v1810, %v1810
      %v1819 = vmul.f32 %v1811, %v1811
      %v1820 = vmul.f32 %v1812, %v1812
      %v1821 = vmul.f32 %v1813, %v1813
      %v1822 = vmul.f32 %v1814, %v1814
      %v1823 = vmul.f32 %v1815, -2.5052108e-08
      %v1824 = vmul.f32 %v1816, -2.5052108e-08
      %v1825 = vmul.f32 %v1817, -2.5052108e-08
      %v1826 = vmul.f32 %v1818, -2.5052108e-08
      %v1827 = vmul.f32 %v1819, -2.5052108e-08
      %v1828 = vmul.f32 %v1820, -2.5052108e-08
      %v1829 = vmul.f32 %v1821, -2.5052108e-08
      %v1830 = vmul.f32 %v1822, -2.5052108e-08
      %v1831 = vadd.f32 %v1823, 2.7557319e-06
      %v1832 = vadd.f32 %v1824, 2.7557319e-06
      %v1833 = vadd.f32 %v1825, 2.7557319e-06
      %v1834 = vadd.f32 %v1826, 2.7557319e-06
      %v1835 = vadd.f32 %v1827, 2.7557319e-06
      %v1836 = vadd.f32 %v1828, 2.7557319e-06
      %v1837 = vadd.f32 %v1829, 2.7557319e-06
      %v1838 = vadd.f32 %v1830, 2.7557319e-06
      %v1839 = vmul.f32 %v1831, %v1815
      %v1840 = vmul.f32 %v1832, %v1816
      %v1841 = vmul.f32 %v1833, %v1817
      %v1842 = vmul.f32 %v1834, %v1818
      %v1843 = vmul.f32 %v1835, %v1819
      %v1844 = vmul.f32 %v1836, %v1820
      %v1845 = vmul.f32 %v1837, %v1821
      %v1846 = vmul.f32 %v1838, %v1822
      %v1847 = vsub.f32 %v1839, 0.0001984127
      %v1848 = vsub.f32 %v1840, 0.0001984127
      %v1849 = vsub.f32 %v1841, 0.0001984127
      %v1850 = vsub.f32 %v1842, 0.0001984127
      %v1851 = vsub.f32 %v1843, 0.0001984127
      %v1852 = vsub.f32 %v1844, 0.0001984127
      %v1853 = vsub.f32 %v1845, 0.0001984127
      %v1854 = vsub.f32 %v1846, 0.0001984127
      %v1855 = vmul.f32 %v1847, %v1815
      %v1856 = vmul.f32 %v1848, %v1816
      %v1857 = vmul.f32 %v1849, %v1817
      %v1858 = vmul.f32 %v1850, %v1818
      %v1859 = vmul.f32 %v1851, %v1819
      %v1860 = vmul.f32 %v1852, %v1820
      %v1861 = vmul.f32 %v1853, %v1821
      %v1862 = vmul.f32 %v1854, %v1822
      %v1863 = vadd.f32 %v1855, 0.008333334
      %v1864 = vadd.f32 %v1856, 0.008333334
      %v1865 = vadd.f32 %v1857, 0.008333334
      %v1866 = vadd.f32 %v1858, 0.008333334
      %v1867 = vadd.f32 %v1859, 0.008333334
      %v1868 = vadd.f32 %v1860, 0.008333334
      %v1869 = vadd.f32 %v1861, 0.008333334
      %v1870 = vadd.f32 %v1862, 0.008333334
      %v1871 = vmul.f32 %v1863, %v1815
      %v1872 = vmul.f32 %v1864, %v1816
      %v1873 = vmul.f32 %v1865, %v1817
      %v1874 = vmul.f32 %v1866, %v1818
      %v1875 = vmul.f32 %v1867, %v1819
      %v1876 = vmul.f32 %v1868, %v1820
      %v1877 = vmul.f32 %v1869, %v1821
      %v1878 = vmul.f32 %v1870, %v1822
      %v1879 = vsub.f32 %v1871, 0.16666667
      %v1880 = vsub.f32 %v1872, 0.16666667
      %v1881 = vsub.f32 %v1873, 0.16666667
      %v1882 = vsub.f32 %v1874, 0.16666667
      %v1883 = vsub.f32 %v1875, 0.16666667
      %v1884 = vsub.f32 %v1876, 0.16666667
      %v1885 = vsub.f32 %v1877, 0.16666667
      %v1886 = vsub.f32 %v1878, 0.16666667
      %v1887 = vmul.f32 %v1815, %v1879
      %v1888 = vmul.f32 %v1816, %v1880
      %v1889 = vmul.f32 %v1817, %v1881
      %v1890 = vmul.f32 %v1818, %v1882
      %v1891 = vmul.f32 %v1819, %v1883
      %v1892 = vmul.f32 %v1820, %v1884
      %v1893 = vmul.f32 %v1821, %v1885
      %v1894 = vmul.f32 %v1822, %v1886
      %v1895 = vmul.f32 %v1807, %v1887
      %v1896 = vmul.f32 %v1808, %v1888
      %v1897 = vmul.f32 %v1809, %v1889
      %v1898 = vmul.f32 %v1810, %v1890
      %v1899 = vmul.f32 %v1811, %v1891
      %v1900 = vmul.f32 %v1812, %v1892
      %v1901 = vmul.f32 %v1813, %v1893
      %v1902 = vmul.f32 %v1814, %v1894
      %v1903 = vadd.f32 %v1807, %v1895
      %v1904 = vadd.f32 %v1808, %v1896
      %v1905 = vadd.f32 %v1809, %v1897
      %v1906 = vadd.f32 %v1810, %v1898
      %v1907 = vadd.f32 %v1811, %v1899
      %v1908 = vadd.f32 %v1812, %v1900
      %v1909 = vadd.f32 %v1813, %v1901
      %v1910 = vadd.f32 %v1814, %v1902
      %v1911 = vadd.f32 %v1261, %v1903
      %v1912 = vadd.f32 %v1262, %v1904
      %v1913 = vadd.f32 %v1263, %v1905
      %v1914 = vadd.f32 %v1264, %v1906
      %v1915 = vadd.f32 %v1265, %v1907
      %v1916 = vadd.f32 %v1266, %v1908
      %v1917 = vadd.f32 %v1267, %v1909
      %v1918 = vadd.f32 %v1268, %v1910
      %v1919 = vld [vmem:[%s11] sm:$0x1]
      %v1920 = vld [vmem:[#allocation2] sm:$0x1]
      %1922 = vset.pattern.permute.xlu0 0
      %1923 = vperm.xlu0 %1922, %v1920
      %v1924 = vpop.permute.xlu0 %1923
      %v1926 = vlaneseq
      %v1927 = vshrl.u32 %v1926, 7
      %v1928 = vsub.s32 0, %v1927
      %v1929 = vrot.slane %v1924, %v1928
      %v1931 = vsel %vm967, %v1919, 0
      %1933 = vmatprep.subr.mxu0 %v1912
      %1934 = vmatpush1.msra.mxu0 %v1911
      %1935 = vmatprep.subr.mxu0 %v1914
      %1936 = vmatpush1.msra.mxu0 %v1913
      %1937 = vmatprep.subr.mxu0 %v1916
      %1938 = vmatpush1.msra.mxu0 %v1915
      %1939 = vmatprep.subr.mxu0 %v1918
      %1940 = vmatpush1.msra.mxu0 %v1917
      %1941 = vmatprep.subr.mxu0 0.0
      %1942 = vmatpush1.msra.mxu0 0.0
      %1943 = vmatprep.subr.mxu0 0.0
      %1944 = vmatpush1.msra.mxu0 0.0
      %1945 = vmatprep.subr.mxu0 0.0
      %1946 = vmatpush1.msra.mxu0 0.0
      %1947 = vmatprep.subr.mxu0 0.0
      %1948 = vmatpush1.msra.mxu0 0.0
      %1949 = vmatprep.subr.mxu0 0.0
      %1950 = vmatpush1.msra.mxu0 0.0
      %1951 = vmatprep.subr.mxu0 0.0
      %1952 = vmatpush1.msra.mxu0 0.0
      %1953 = vmatprep.subr.mxu0 0.0
      %1954 = vmatpush1.msra.mxu0 0.0
      %1955 = vmatprep.subr.mxu0 0.0
      %1956 = vmatpush1.msra.mxu0 0.0
      %1957 = vmatprep.subr.mxu0 0.0
      %1958 = vmatpush1.msra.mxu0 0.0
      %1959 = vmatprep.subr.mxu0 0.0
      %1960 = vmatpush1.msra.mxu0 0.0
      %1961 = vmatprep.subr.mxu0 0.0
      %1962 = vmatpush1.msra.mxu0 0.0
      %1963 = vmatprep.subr.mxu0 0.0
      %1964 = vmatpush1.msra.mxu0 0.0
      %1965 = vmatprep.subr.mxu0 0.0
      %1966 = vmatpush1.msra.mxu0 0.0
      %1967 = vmatprep.subr.mxu0 0.0
      %1968 = vmatpush1.msra.mxu0 0.0
      %1969 = vmatprep.subr.mxu0 0.0
      %1970 = vmatpush1.msra.mxu0 0.0
      %1971 = vmatprep.subr.mxu0 0.0
      %1972 = vmatpush1.msra.mxu0 0.0
      %1973 = vmatprep.subr.mxu0 0.0
      %1974 = vmatpush1.msra.mxu0 0.0
      %1975 = vmatprep.subr.mxu0 0.0
      %1976 = vmatpush1.msra.mxu0 0.0
      %1977 = vmatprep.subr.mxu0 0.0
      %1978 = vmatpush1.msra.mxu0 0.0
      %1979 = vmatprep.subr.mxu0 0.0
      %1980 = vmatpush1.msra.mxu0 0.0
      %1981 = vmatprep.subr.mxu0 0.0
      %1982 = vmatpush1.msra.mxu0 0.0
      %1983 = vmatprep.subr.mxu0 0.0
      %1984 = vmatpush1.msra.mxu0 0.0
      %1985 = vmatprep.subr.mxu0 0.0
      %1986 = vmatpush1.msra.mxu0 0.0
      %1987 = vmatprep.subr.mxu0 0.0
      %1988 = vmatpush1.msra.mxu0 0.0
      %1989 = vmatprep.subr.mxu0 0.0
      %1990 = vmatpush1.msra.mxu0 0.0
      %1991 = vmatprep.subr.mxu0 0.0
      %1992 = vmatpush1.msra.mxu0 0.0
      %1993 = vmatprep.subr.mxu0 0.0
      %1994 = vmatpush1.msra.mxu0 0.0
      %1995 = vmatprep.subr.mxu0 0.0
      %1996 = vmatpush1.msra.mxu0 0.0
      %1997 = vmatprep.mubr.f32.mxu0 0.0
      %1998 = vmatmul.mubr.f32.gmra.mrb[0].mxu0 %v1931
      %v1999 = vpop.f32.mrb[0].mxu0
      %v2000 = vadd.f32 %v1929, %v1999
      %v2001 = vpop.f32.mrb[0].mxu0
      %v2002 = vadd.f32 %v1929, %v2001
      %2003 = vdwg.mxu0
      %v2006 = vcombine.low %v2000, %v2002
      %v2008 = vunpack.c.l.s4 1966171168
      %v2009 = vunpack.c.0.s8 %v2008
      %v2010 = vlaneseq
      %v2011 = vshrl.u32 %v2010, 7
      %v2012 = vsub.s32 %v2009, %v2011
      %v2013 = vrot.slane %v2006, %v2012
      %v2015 = vunpack.c.l.s4 1966171168
      %v2016 = vunpack.c.0.s8 %v2015
      %v2017 = vlaneseq
      %v2018 = vshrl.u32 %v2017, 7
      %v2019 = vsub.s32 %v2016, %v2018
      %v2020 = vrot.slane %v2013, %v2019
      %v2022 = vlaneseq
      %vm2023 = vcmp.ge.s32.totalorder %v2022, 0
      %vm2024 = vcmp.lt.s32.totalorder %v2022, 256
      %vm2025 = vmand %vm2023, %vm2024
      %2026 = vst.msk [vmem:[%s478] sm:$0x3] %vm2025, %v2020
      %s2027 = smul.u32 2, %s31
      %p2028 = scmp.lt.s32.totalorder %s30, 1
      %s2029 = scalar_select %p2028, %s30, 1
      %p2030 = scmp.lt.s32.totalorder %s2027, 1
      %s2031 = scalar_select %p2030, %s2027, 1
      %s2032 = smul.addr %s2029, 2
      %s2033 = sadd.s32 %s2031, %s2032
      %s2034 = scalar_lea.vmem %s13, %s2033
      // Predicated region
      $region73: #{fcnet_forward.1} parent=71 // pred_check
        %p2035 = pneg %p338
      $region74: #{fcnet_forward.1} parent=71 // pred_check_branch
        %2037 = sbr.rel (%p2035) target = $region76
      $region75: #{fcnet_forward.1} parent=71 // pred_region
        %s2038 = smul.u32 2, %s31
      $region76: #{fcnet_forward.1} parent=71 // pred_fallthru
        _
    $region72: #{fcnet_forward.1} parent=5 // pred_fallthru
      _
    %p2039 = scmp.le.s32.totalorder 2, %s21
    // Predicated region
    $region77: #{fcnet_forward.1} parent=5 // pred_check
      %p2040 = pneg %p2039
    $region78: #{fcnet_forward.1} parent=5 // pred_check_branch
      %2042 = sbr.rel (%p2040) target = $region80
    $region79: #{fcnet_forward.1} parent=5 // pred_region
      %s2043 = ssub.s32 %s21, 2
      // Predicated region
      $region81: #{fcnet_forward.1} parent=79 // pred_check
        %p2044 = pneg %p344
      $region82: #{fcnet_forward.1} parent=79 // pred_check_branch
        %2046 = sbr.rel (%p2044) target = $region84
      $region83: #{fcnet_forward.1} parent=79 // pred_region
        %s2047 = smul.u32 2, %s33
        %p2048 = scmp.lt.s32.totalorder %s32, 1
        %s2049 = scalar_select %p2048, %s32, 1
        %p2050 = scmp.lt.s32.totalorder %s2047, 1
        %s2051 = scalar_select %p2050, %s2047, 1
        %s2052 = smul.addr %s2049, 2
        %s2053 = sadd.s32 %s2051, %s2052
        %s2054 = scalar_lea.vmem %s13, %s2053
      $region84: #{fcnet_forward.1} parent=79 // pred_fallthru
        _
    $region80: #{fcnet_forward.1} parent=5 // pred_fallthru
      _
  $region6: #{fcnet_forward.1} parent=0 // loop_footer
    %s25 = sadd.s32 1, %s21
  $region7: #{fcnet_forward.1} parent=0 // loop_footer_branch
    %20 = sbr.rel target = $region3
  $region8: #{fcnet_forward.1} parent=0 // loop_exit
    _

</llo_original>
